<compile_context>
chip_gen: v7x
topology: tpu7x:2x2x1
jax: 0.10.0
libtpu: 0.0.40
codegen_flags: <defaults>
</compile_context>

<pallas_src>
import functools

import jax
import jax.numpy as jnp
from jax.experimental import pallas as pl
from jax.experimental.pallas import tpu as pltpu


# ----------------------------- config -------------------------------------
class GPTConfig:
    def __init__(self, **kw):
        self.block_size = 16
        self.vocab_size = 64
        self.n_layer = 2
        self.n_head = 4
        self.n_embd = 32
        self.dropout = 0.2  # unused (eval mode)
        for k, v in kw.items():
            setattr(self, k, v)


def _round_up(n, m):
    return (n + m - 1) // m * m


# --------------------------- kernel helpers --------------------------------
def _layer_norm(x, g, b, eps=1e-5):
    # x: (T, C), g/b: (1, C).  Biased variance, matching torch.nn.LayerNorm.
    mu = jnp.mean(x, axis=-1, keepdims=True)
    var = jnp.mean((x - mu) ** 2, axis=-1, keepdims=True)
    return (x - mu) * jax.lax.rsqrt(var + eps) * g + b


# --------------------------- fused GPT kernel -------------------------------
def _gpt_kernel(n_head,
                x_ref,
                w_qkv_ref, w_proj_ref, b_proj_ref,
                w1_ref, b1_ref, w2_ref, b2_ref,
                ln1g_ref, ln1b_ref, ln2g_ref, ln2b_ref,
                lnfg_ref, lnfb_ref, wh_ref, bh_ref,
                o_ref, act_ref):
    l = pl.program_id(1)
    n_layer = pl.num_programs(1)
    T, C = act_ref.shape
    H = n_head
    hs = C // H

    # Load this batch element's embedded tokens into the resident activation.
    @pl.when(l == 0)
    def _():
        act_ref[...] = x_ref[0]

    x = act_ref[...]                                     # (T, C) f32
    x16 = x.astype(jnp.bfloat16)

    # Additive finite causal-mask bias: 0 where attended, -1e30 where masked.
    row = jax.lax.broadcasted_iota(jnp.int32, (T, T), 0)
    col = jax.lax.broadcasted_iota(jnp.int32, (T, T), 1)
    bias = jnp.where(row >= col, 0.0, -1e30).astype(jnp.float32)

    # ---- multi-head causal self-attention ----------------------------------
    # Fused QKV: one lane-dense (T, C) @ (C, 3C) bf16 matmul (no bias, as in
    # Head; the 1/sqrt(hs) score scale is pre-folded into the Q columns).
    qkv = jnp.dot(x16, w_qkv_ref[0], preferred_element_type=jnp.float32)  # (T,3C)

    # Head-major relayout (H, T, hs): done once so scores / p@v / projection
    # are single head-batched dot_generals (no per-head matmul loop).
    def heads(base):
        return jnp.stack(
            [qkv[:, base + h * hs: base + (h + 1) * hs] for h in range(H)],
            axis=0)

    q = heads(0 * C).astype(jnp.bfloat16)                # (H, T, hs)
    k = heads(1 * C).astype(jnp.bfloat16)
    v = heads(2 * C).astype(jnp.bfloat16)

    # Scores q @ k^T batched over heads (contracting dims, no materialized kT).
    s = jax.lax.dot_general(q, k, (((2,), (2,)), ((0,), (0,))),
                            preferred_element_type=jnp.float32)           # (H,T,T)
    s = s + bias[None, :, :]
    s = s - jnp.max(s, axis=-1, keepdims=True)
    p = jnp.exp(s)
    p = p * pl.reciprocal(jnp.sum(p, axis=-1, keepdims=True), approx=True)

    o = jax.lax.dot_general(p.astype(jnp.bfloat16), v,
                            (((2,), (1,)), ((0,), (0,))),
                            preferred_element_type=jnp.float32)           # (H,T,hs)

    # Head merge folded into the output projection, batched over heads:
    #   concat(heads) @ Wproj == sum_h (o_h @ Wproj[h])
    attn = jax.lax.dot_general(o.astype(jnp.bfloat16), w_proj_ref[0],
                               (((2,), (1,)), ((0,), (0,))),
                               preferred_element_type=jnp.float32)        # (H,T,C)
    attn = jnp.sum(attn, axis=0) + b_proj_ref[0]                          # (T,C)

    # ---- post-norm residual block (matches the PyTorch Block) --------------
    h1 = _layer_norm(attn + x, ln1g_ref[0], ln1b_ref[0])

    f = jnp.dot(h1.astype(jnp.bfloat16), w1_ref[0],
                preferred_element_type=jnp.float32) + b1_ref[0]
    f = jnp.maximum(f, 0.0)
    f = jnp.dot(f.astype(jnp.bfloat16), w2_ref[0],
                preferred_element_type=jnp.float32) + b2_ref[0]
    h2 = _layer_norm(f + h1, ln2g_ref[0], ln2b_ref[0])

    act_ref[...] = h2

    # ---- final LayerNorm + lm_head on the last layer step ------------------
    @pl.when(l == n_layer - 1)
    def _():
        xf = _layer_norm(h2, lnfg_ref[...], lnfb_ref[...])
        o_ref[0] = jnp.dot(xf.astype(jnp.bfloat16), wh_ref[...],
                           preferred_element_type=jnp.float32) + bh_ref[...]


# ------------------------------ wrapper -------------------------------------
def _layer_spec(dims):
    """Per-layer stacked weight (L, *dims): one layer's block per grid step."""
    zeros = (0,) * len(dims)
    return pl.BlockSpec((1,) + dims, lambda b, l: (l,) + zeros)


def _shared_spec(dims):
    """Layer-independent weight: same (fully resident) block every step."""
    zeros = (0,) * len(dims)
    return pl.BlockSpec(dims, lambda b, l: zeros)


def gpt_fused_forward(x3d, params, cfg):
    """x3d: (B, T, C) f32 embedded tokens -> padded logits (B, T, Vpad) f32."""
    B, T, C = x3d.shape
    L, H = cfg.n_layer, cfg.n_head
    hs = C // H
    F4 = 4 * C
    Vp = params["w_head_pad"].shape[1]

    weight_args = (params["w_qkv"], params["w_proj"], params["b_proj"],
                   params["w1"], params["b1"], params["w2"], params["b2"],
                   params["ln1_g"], params["ln1_b"],
                   params["ln2_g"], params["ln2_b"],
                   params["ln_f_g"], params["ln_f_b"],
                   params["w_head_pad"], params["b_head_pad"])

    in_specs = [
        pl.BlockSpec((1, T, C), lambda b, l: (b, 0, 0)),   # x
        _layer_spec((C, 3 * C)),                           # w_qkv
        _layer_spec((H, hs, C)),                           # w_proj (head-major)
        _layer_spec((1, C)),                               # b_proj
        _layer_spec((C, F4)),                              # w1
        _layer_spec((1, F4)),                              # b1
        _layer_spec((F4, C)),                              # w2
        _layer_spec((1, C)),                               # b2
        _layer_spec((1, C)), _layer_spec((1, C)),          # ln1 g/b
        _layer_spec((1, C)), _layer_spec((1, C)),          # ln2 g/b
        _shared_spec((1, C)), _shared_spec((1, C)),        # ln_f g/b
        _shared_spec((C, Vp)), _shared_spec((1, Vp)),      # lm_head w/b
    ]

    flops = B * L * (2 * T * C * 3 * C                     # fused qkv
                     + H * (2 * T * T * hs                 # scores
                            + 2 * T * T * hs               # p @ v
                            + 2 * T * hs * C)              # head-merge proj
                     + 2 * T * C * F4 + 2 * T * F4 * C)    # ffn
    flops += B * 2 * T * C * Vp                            # lm_head
    transcendentals = B * L * H * T * T                    # softmax exp
    bytes_accessed = (x3d.size * 4 + B * T * Vp * 4
                      + B * sum(int(a.size) * a.dtype.itemsize for a in weight_args))

    kernel = functools.partial(_gpt_kernel, H)
    return pl.pallas_call(
        kernel,
        out_shape=jax.ShapeDtypeStruct((B, T, Vp), jnp.float32),
        grid_spec=pltpu.PrefetchScalarGridSpec(
            num_scalar_prefetch=0,
            grid=(B, L),
            in_specs=in_specs,
            out_specs=pl.BlockSpec((1, T, Vp), lambda b, l: (b, 0, 0)),
            scratch_shapes=[pltpu.VMEM((T, C), jnp.float32)],   # resident activation
        ),
        compiler_params=pltpu.CompilerParams(
            dimension_semantics=("parallel", "arbitrary"),
            # Headroom for double-buffered per-layer weights; safe on v7x's
            # 64 MiB and well under v5e/v6e's 128 MiB.
            vmem_limit_bytes=48 * 1024 * 1024,
        ),
        cost_estimate=pl.CostEstimate(flops=int(flops),
                                      transcendentals=int(transcendentals),
                                      bytes_accessed=int(bytes_accessed)),
    )(x3d, *weight_args)


# ------------------------------ parameters ----------------------------------
def init_params(cfg: GPTConfig, key):
    C, V, Tm = cfg.n_embd, cfg.vocab_size, cfg.block_size
    L, H = cfg.n_layer, cfg.n_head
    hs = C // H
    F4 = 4 * C
    Vp = _round_up(V, 128)
    keys = iter(jax.random.split(key, 8))

    def rnd(shape, scale):
        return (scale * jax.random.normal(next(keys), shape)).astype(jnp.float32)

    # Fused QKV weight [Wq | Wk | Wv]; fold the 1/sqrt(hs) attention scale into Q.
    w_qkv = rnd((L, C, 3 * C), C ** -0.5)
    w_qkv = w_qkv.at[:, :, :C].multiply(hs ** -0.5)

    w_head = rnd((C, V), C ** -0.5)

    return {
        # embeddings (plain-JAX gather glue)
        "tok_emb": rnd((V, C), 0.02),
        "pos_emb": rnd((Tm, C), 0.02),
        # per-layer stacked weights; matmul operands stored bf16 (MXU-native)
        "w_qkv": w_qkv.astype(jnp.bfloat16),
        "w_proj": rnd((L, H, hs, C), C ** -0.5).astype(jnp.bfloat16),  # head-major
        "b_proj": jnp.zeros((L, 1, C), jnp.float32),
        "w1": rnd((L, C, F4), C ** -0.5).astype(jnp.bfloat16),
        "b1": jnp.zeros((L, 1, F4), jnp.float32),
        "w2": rnd((L, F4, C), F4 ** -0.5).astype(jnp.bfloat16),
        "b2": jnp.zeros((L, 1, C), jnp.float32),
        "ln1_g": jnp.ones((L, 1, C), jnp.float32),
        "ln1_b": jnp.zeros((L, 1, C), jnp.float32),
        "ln2_g": jnp.ones((L, 1, C), jnp.float32),
        "ln2_b": jnp.zeros((L, 1, C), jnp.float32),
        "ln_f_g": jnp.ones((1, C), jnp.float32),
        "ln_f_b": jnp.zeros((1, C), jnp.float32),
        # lm_head padded to a lane-dense 128-multiple vocab (zero padding)
        "w_head_pad": jnp.pad(w_head, ((0, 0), (0, Vp - V))).astype(jnp.bfloat16),
        "b_head_pad": jnp.zeros((1, Vp), jnp.float32),
    }


# ------------------------------ forward pass --------------------------------
def gpt_forward(params, tokens, cfg: GPTConfig):
    """tokens: (B, T) int32 -> logits (B, T, vocab_size) float32."""
    B, T = tokens.shape
    V = cfg.vocab_size
    tok_e = jnp.take(params["tok_emb"], tokens, axis=0)          # (B, T, C)
    pos_e = params["pos_emb"][:T]                                # (T, C)
    x = (tok_e + pos_e[None, :, :]).astype(jnp.float32)          # (B, T, C)

    logits_pad = gpt_fused_forward(x, params, cfg)               # (B, T, Vpad)
    return logits_pad[..., :V]                                   # strip padding


# ----------------------------------- main -----------------------------------
if __name__ == "__main__":
    cfg = GPTConfig(block_size=16, vocab_size=64, n_layer=2, n_head=4, n_embd=32)
    B, T = 2, 8

    key = jax.random.PRNGKey(0)
    k_par, k_tok = jax.random.split(key)
    params = init_params(cfg, k_par)
    tokens = jax.random.randint(k_tok, (B, T), 0, cfg.vocab_size, dtype=jnp.int32)

    logits = gpt_forward(params, tokens, cfg)
    jax.block_until_ready(logits)

    assert logits.shape == (B, T, cfg.vocab_size)
    assert logits.dtype == jnp.float32
    assert bool(jnp.all(jnp.isfinite(logits)))
    print("KERNEL_OK")
</pallas_src>

<mosaic_0001>
module attributes {stable_mosaic.version = 11 : i64} {
  func.func @_gpt_kernel(%arg0: i32, %arg1: i32, %arg2: memref<1x8x32xf32, #tpu.memory_space<vmem>>, %arg3: memref<1x32x96xbf16, #tpu.memory_space<vmem>>, %arg4: memref<1x4x8x32xbf16, #tpu.memory_space<vmem>>, %arg5: memref<1x1x32xf32, #tpu.memory_space<vmem>>, %arg6: memref<1x32x128xbf16, #tpu.memory_space<vmem>>, %arg7: memref<1x1x128xf32, #tpu.memory_space<vmem>>, %arg8: memref<1x128x32xbf16, #tpu.memory_space<vmem>>, %arg9: memref<1x1x32xf32, #tpu.memory_space<vmem>>, %arg10: memref<1x1x32xf32, #tpu.memory_space<vmem>>, %arg11: memref<1x1x32xf32, #tpu.memory_space<vmem>>, %arg12: memref<1x1x32xf32, #tpu.memory_space<vmem>>, %arg13: memref<1x1x32xf32, #tpu.memory_space<vmem>>, %arg14: memref<1x32xf32, #tpu.memory_space<vmem>>, %arg15: memref<1x32xf32, #tpu.memory_space<vmem>>, %arg16: memref<32x128xbf16, #tpu.memory_space<vmem>>, %arg17: memref<1x128xf32, #tpu.memory_space<vmem>>, %arg18: memref<1x8x128xf32, #tpu.memory_space<vmem>>, %arg19: memref<8x32xf32, #tpu.memory_space<vmem>>) attributes {dimension_semantics = [#tpu.dimension_semantics<parallel>, #tpu.dimension_semantics<arbitrary>], iteration_bounds = array<i64: 2, 2>, scalar_prefetch = 0 : i64, scratch_operands = 1 : i64, tpu.core_type = #tpu.core_type<tc>, window_params = [{transform_indices = @transform_0, window_bounds = array<i64: 1, 8, 32>}, {transform_indices = @transform_1, window_bounds = array<i64: 1, 32, 96>}, {transform_indices = @transform_2, window_bounds = array<i64: 1, 4, 8, 32>}, {transform_indices = @transform_3, window_bounds = array<i64: 1, 1, 32>}, {transform_indices = @transform_4, window_bounds = array<i64: 1, 32, 128>}, {transform_indices = @transform_5, window_bounds = array<i64: 1, 1, 128>}, {transform_indices = @transform_6, window_bounds = array<i64: 1, 128, 32>}, {transform_indices = @transform_7, window_bounds = array<i64: 1, 1, 32>}, {transform_indices = @transform_8, window_bounds = array<i64: 1, 1, 32>}, {transform_indices = @transform_9, window_bounds = array<i64: 1, 1, 32>}, {transform_indices = @transform_10, window_bounds = array<i64: 1, 1, 32>}, {transform_indices = @transform_11, window_bounds = array<i64: 1, 1, 32>}, {pipeline_mode = #tpu.pipeline_mode<synchronous>, transform_indices = @transform_12, window_bounds = array<i64: 1, 32>}, {pipeline_mode = #tpu.pipeline_mode<synchronous>, transform_indices = @transform_13, window_bounds = array<i64: 1, 32>}, {pipeline_mode = #tpu.pipeline_mode<synchronous>, transform_indices = @transform_14, window_bounds = array<i64: 32, 128>}, {pipeline_mode = #tpu.pipeline_mode<synchronous>, transform_indices = @transform_15, window_bounds = array<i64: 1, 128>}, {transform_indices = @transform_16, window_bounds = array<i64: 1, 8, 128>}]} {
    %c0_i32 = arith.constant 0 : i32
    %0 = arith.cmpi eq, %arg1, %c0_i32 : i32
    %1 = arith.extui %0 : i1 to i32
    %c0_i32_0 = arith.constant 0 : i32
    %2 = arith.cmpi ne, %1, %c0_i32_0 : i32
    scf.if %2 {
      %c0_60 = arith.constant 0 : index
      %c0_61 = arith.constant 0 : index
      %c0_62 = arith.constant 0 : index
      %145 = vector.load %arg2[%c0_60, %c0_61, %c0_62] : memref<1x8x32xf32, #tpu.memory_space<vmem>>, vector<1x8x32xf32>
      %146 = vector.shape_cast %145 : vector<1x8x32xf32> to vector<8x32xf32>
      %c0_63 = arith.constant 0 : index
      %c0_64 = arith.constant 0 : index
      %147 = vector.load %arg19[%c0_63, %c0_64] : memref<8x32xf32, #tpu.memory_space<vmem>>, vector<8x32xf32>
      tpu.vector_store %arg19[%c0_63, %c0_64], %146 {strides = array<i32>} : memref<8x32xf32, #tpu.memory_space<vmem>>, vector<8x32xf32>,
    } else {
    }
    %c0 = arith.constant 0 : index
    %c0_1 = arith.constant 0 : index
    %3 = vector.load %arg19[%c0, %c0_1] : memref<8x32xf32, #tpu.memory_space<vmem>>, vector<8x32xf32>
    %4 = arith.truncf %3 : vector<8x32xf32> to vector<8x32xbf16>
    %5 = tpu.iota {dimensions = array<i32: 0>} : vector<8x8xi32>
    %6 = tpu.iota {dimensions = array<i32: 1>} : vector<8x8xi32>
    %7 = arith.cmpi sge, %5, %6 : vector<8x8xi32>
    %cst = arith.constant 0.000000e+00 : f32
    %cst_2 = arith.constant -1.000000e+30 : f32
    %8 = vector.broadcast %cst : f32 to vector<8x8xf32>
    %9 = vector.broadcast %cst_2 : f32 to vector<8x8xf32>
    %10 = arith.select %7, %8, %9 : vector<8x8xi1>, vector<8x8xf32>
    %c0_3 = arith.constant 0 : index
    %c0_4 = arith.constant 0 : index
    %c0_5 = arith.constant 0 : index
    %11 = vector.load %arg3[%c0_3, %c0_4, %c0_5] : memref<1x32x96xbf16, #tpu.memory_space<vmem>>, vector<1x32x96xbf16>
    %12 = vector.shape_cast %11 : vector<1x32x96xbf16> to vector<32x96xbf16>
    %cst_6 = arith.constant dense<0.000000e+00> : vector<8x96xf32>
    %13 = tpu.matmul %4, %12, %cst_6 {dimension_numbers = #tpu.dot_dimension_numbers<[1], [0], [0], [1], [0, 0, 1, 1], [], []>} : vector<8x32xbf16>, vector<32x96xbf16>, vector<8x96xf32> -> vector<8x96xf32>
    %14 = vector.extract_strided_slice %13 {offsets = [0, 0], sizes = [8, 8], strides = [1, 1]} : vector<8x96xf32> to vector<8x8xf32>
    %15 = vector.extract_strided_slice %13 {offsets = [0, 8], sizes = [8, 8], strides = [1, 1]} : vector<8x96xf32> to vector<8x8xf32>
    %16 = vector.extract_strided_slice %13 {offsets = [0, 16], sizes = [8, 8], strides = [1, 1]} : vector<8x96xf32> to vector<8x8xf32>
    %17 = vector.extract_strided_slice %13 {offsets = [0, 24], sizes = [8, 8], strides = [1, 1]} : vector<8x96xf32> to vector<8x8xf32>
    %18 = vector.shape_cast %14 : vector<8x8xf32> to vector<1x8x8xf32>
    %19 = vector.shape_cast %15 : vector<8x8xf32> to vector<1x8x8xf32>
    %20 = vector.shape_cast %16 : vector<8x8xf32> to vector<1x8x8xf32>
    %21 = vector.shape_cast %17 : vector<8x8xf32> to vector<1x8x8xf32>
    %22 = tpu.concatenate %18, %19, %20, %21 in 0 : vector<1x8x8xf32>, vector<1x8x8xf32>, vector<1x8x8xf32>, vector<1x8x8xf32> -> vector<4x8x8xf32>
    %23 = arith.truncf %22 : vector<4x8x8xf32> to vector<4x8x8xbf16>
    %24 = vector.extract_strided_slice %13 {offsets = [0, 32], sizes = [8, 8], strides = [1, 1]} : vector<8x96xf32> to vector<8x8xf32>
    %25 = vector.extract_strided_slice %13 {offsets = [0, 40], sizes = [8, 8], strides = [1, 1]} : vector<8x96xf32> to vector<8x8xf32>
    %26 = vector.extract_strided_slice %13 {offsets = [0, 48], sizes = [8, 8], strides = [1, 1]} : vector<8x96xf32> to vector<8x8xf32>
    %27 = vector.extract_strided_slice %13 {offsets = [0, 56], sizes = [8, 8], strides = [1, 1]} : vector<8x96xf32> to vector<8x8xf32>
    %28 = vector.shape_cast %24 : vector<8x8xf32> to vector<1x8x8xf32>
    %29 = vector.shape_cast %25 : vector<8x8xf32> to vector<1x8x8xf32>
    %30 = vector.shape_cast %26 : vector<8x8xf32> to vector<1x8x8xf32>
    %31 = vector.shape_cast %27 : vector<8x8xf32> to vector<1x8x8xf32>
    %32 = tpu.concatenate %28, %29, %30, %31 in 0 : vector<1x8x8xf32>, vector<1x8x8xf32>, vector<1x8x8xf32>, vector<1x8x8xf32> -> vector<4x8x8xf32>
    %33 = arith.truncf %32 : vector<4x8x8xf32> to vector<4x8x8xbf16>
    %34 = vector.extract_strided_slice %13 {offsets = [0, 64], sizes = [8, 8], strides = [1, 1]} : vector<8x96xf32> to vector<8x8xf32>
    %35 = vector.extract_strided_slice %13 {offsets = [0, 72], sizes = [8, 8], strides = [1, 1]} : vector<8x96xf32> to vector<8x8xf32>
    %36 = vector.extract_strided_slice %13 {offsets = [0, 80], sizes = [8, 8], strides = [1, 1]} : vector<8x96xf32> to vector<8x8xf32>
    %37 = vector.extract_strided_slice %13 {offsets = [0, 88], sizes = [8, 8], strides = [1, 1]} : vector<8x96xf32> to vector<8x8xf32>
    %38 = vector.shape_cast %34 : vector<8x8xf32> to vector<1x8x8xf32>
    %39 = vector.shape_cast %35 : vector<8x8xf32> to vector<1x8x8xf32>
    %40 = vector.shape_cast %36 : vector<8x8xf32> to vector<1x8x8xf32>
    %41 = vector.shape_cast %37 : vector<8x8xf32> to vector<1x8x8xf32>
    %42 = tpu.concatenate %38, %39, %40, %41 in 0 : vector<1x8x8xf32>, vector<1x8x8xf32>, vector<1x8x8xf32>, vector<1x8x8xf32> -> vector<4x8x8xf32>
    %43 = arith.truncf %42 : vector<4x8x8xf32> to vector<4x8x8xbf16>
    %cst_7 = arith.constant dense<0.000000e+00> : vector<4x8x8xf32>
    %44 = tpu.matmul %23, %33, %cst_7 {dimension_numbers = #tpu.dot_dimension_numbers<[2], [2], [1], [1], [0, 0, 0, 1, 1, 1], [0], [0]>} : vector<4x8x8xbf16>, vector<4x8x8xbf16>, vector<4x8x8xf32> -> vector<4x8x8xf32>
    %45 = vector.shape_cast %10 : vector<8x8xf32> to vector<1x8x8xf32>
    %46 = vector.broadcast %45 : vector<1x8x8xf32> to vector<4x8x8xf32>
    %47 = arith.addf %44, %46 : vector<4x8x8xf32>
    %cst_8 = arith.constant dense<0xFF800000> : vector<4x8xf32>
    %48 = vector.multi_reduction <maximumf>, %47, %cst_8 [2] : vector<4x8x8xf32> to vector<4x8xf32>
    %49 = vector.shape_cast %48 : vector<4x8xf32> to vector<4x8x1xf32>
    %50 = vector.broadcast %49 : vector<4x8x1xf32> to vector<4x8x8xf32>
    %51 = arith.subf %47, %50 : vector<4x8x8xf32>
    %52 = math.exp %51 : vector<4x8x8xf32>
    %cst_9 = arith.constant dense<0.000000e+00> : vector<4x8xf32>
    %53 = vector.multi_reduction <add>, %52, %cst_9 [2] : vector<4x8x8xf32> to vector<4x8xf32>
    %54 = vector.shape_cast %53 : vector<4x8xf32> to vector<4x8x1xf32>
    %55 = tpu.reciprocal %54 {approx = true} : vector<4x8x1xf32> -> vector<4x8x1xf32>
    %56 = vector.broadcast %55 : vector<4x8x1xf32> to vector<4x8x8xf32>
    %57 = arith.mulf %52, %56 : vector<4x8x8xf32>
    %58 = arith.truncf %57 : vector<4x8x8xf32> to vector<4x8x8xbf16>
    %cst_10 = arith.constant dense<0.000000e+00> : vector<4x8x8xf32>
    %59 = tpu.matmul %58, %43, %cst_10 {dimension_numbers = #tpu.dot_dimension_numbers<[2], [1], [1], [2], [0, 0, 0, 1, 1, 2], [0], [0]>} : vector<4x8x8xbf16>, vector<4x8x8xbf16>, vector<4x8x8xf32> -> vector<4x8x8xf32>
    %60 = arith.truncf %59 : vector<4x8x8xf32> to vector<4x8x8xbf16>
    %c0_11 = arith.constant 0 : index
    %c0_12 = arith.constant 0 : index
    %c0_13 = arith.constant 0 : index
    %c0_14 = arith.constant 0 : index
    %61 = vector.load %arg4[%c0_11, %c0_12, %c0_13, %c0_14] : memref<1x4x8x32xbf16, #tpu.memory_space<vmem>>, vector<1x4x8x32xbf16>
    %62 = vector.shape_cast %61 : vector<1x4x8x32xbf16> to vector<4x8x32xbf16>
    %cst_15 = arith.constant dense<0.000000e+00> : vector<4x8x32xf32>
    %63 = tpu.matmul %60, %62, %cst_15 {dimension_numbers = #tpu.dot_dimension_numbers<[2], [1], [1], [2], [0, 0, 0, 1, 1, 2], [0], [0]>} : vector<4x8x8xbf16>, vector<4x8x32xbf16>, vector<4x8x32xf32> -> vector<4x8x32xf32>
    %cst_16 = arith.constant dense<0.000000e+00> : vector<8x32xf32>
    %64 = vector.multi_reduction <add>, %63, %cst_16 [0] : vector<4x8x32xf32> to vector<8x32xf32>
    %c0_17 = arith.constant 0 : index
    %c0_18 = arith.constant 0 : index
    %c0_19 = arith.constant 0 : index
    %65 = vector.load %arg5[%c0_17, %c0_18, %c0_19] : memref<1x1x32xf32, #tpu.memory_space<vmem>>, vector<1x1x32xf32>
    %66 = vector.shape_cast %65 : vector<1x1x32xf32> to vector<1x32xf32>
    %67 = vector.broadcast %66 : vector<1x32xf32> to vector<8x32xf32>
    %68 = arith.addf %64, %67 : vector<8x32xf32>
    %69 = arith.addf %68, %3 : vector<8x32xf32>
    %c0_20 = arith.constant 0 : index
    %c0_21 = arith.constant 0 : index
    %c0_22 = arith.constant 0 : index
    %70 = vector.load %arg10[%c0_20, %c0_21, %c0_22] : memref<1x1x32xf32, #tpu.memory_space<vmem>>, vector<1x1x32xf32>
    %71 = vector.shape_cast %70 : vector<1x1x32xf32> to vector<1x32xf32>
    %c0_23 = arith.constant 0 : index
    %c0_24 = arith.constant 0 : index
    %c0_25 = arith.constant 0 : index
    %72 = vector.load %arg11[%c0_23, %c0_24, %c0_25] : memref<1x1x32xf32, #tpu.memory_space<vmem>>, vector<1x1x32xf32>
    %73 = vector.shape_cast %72 : vector<1x1x32xf32> to vector<1x32xf32>
    %cst_26 = arith.constant dense<0.000000e+00> : vector<8xf32>
    %74 = vector.multi_reduction <add>, %69, %cst_26 [1] : vector<8x32xf32> to vector<8xf32>
    %75 = vector.shape_cast %74 : vector<8xf32> to vector<8x1xf32>
    %cst_27 = arith.constant 3.200000e+01 : f32
    %76 = vector.broadcast %cst_27 : f32 to vector<8x1xf32>
    %77 = arith.divf %75, %76 : vector<8x1xf32>
    %78 = vector.broadcast %77 : vector<8x1xf32> to vector<8x32xf32>
    %79 = arith.subf %69, %78 : vector<8x32xf32>
    %80 = arith.mulf %79, %79 : vector<8x32xf32>
    %cst_28 = arith.constant dense<0.000000e+00> : vector<8xf32>
    %81 = vector.multi_reduction <add>, %80, %cst_28 [1] : vector<8x32xf32> to vector<8xf32>
    %82 = vector.shape_cast %81 : vector<8xf32> to vector<8x1xf32>
    %cst_29 = arith.constant 3.200000e+01 : f32
    %83 = vector.broadcast %cst_29 : f32 to vector<8x1xf32>
    %84 = arith.divf %82, %83 : vector<8x1xf32>
    %85 = vector.broadcast %77 : vector<8x1xf32> to vector<8x32xf32>
    %86 = arith.subf %69, %85 : vector<8x32xf32>
    %cst_30 = arith.constant 9.99999974E-6 : f32
    %87 = vector.broadcast %cst_30 : f32 to vector<8x1xf32>
    %88 = arith.addf %84, %87 : vector<8x1xf32>
    %89 = math.rsqrt %88 : vector<8x1xf32>
    %90 = vector.broadcast %89 : vector<8x1xf32> to vector<8x32xf32>
    %91 = arith.mulf %86, %90 : vector<8x32xf32>
    %92 = vector.broadcast %71 : vector<1x32xf32> to vector<8x32xf32>
    %93 = arith.mulf %91, %92 : vector<8x32xf32>
    %94 = vector.broadcast %73 : vector<1x32xf32> to vector<8x32xf32>
    %95 = arith.addf %93, %94 : vector<8x32xf32>
    %96 = arith.truncf %95 : vector<8x32xf32> to vector<8x32xbf16>
    %c0_31 = arith.constant 0 : index
    %c0_32 = arith.constant 0 : index
    %c0_33 = arith.constant 0 : index
    %97 = vector.load %arg6[%c0_31, %c0_32, %c0_33] : memref<1x32x128xbf16, #tpu.memory_space<vmem>>, vector<1x32x128xbf16>
    %98 = vector.shape_cast %97 : vector<1x32x128xbf16> to vector<32x128xbf16>
    %cst_34 = arith.constant dense<0.000000e+00> : vector<8x128xf32>
    %99 = tpu.matmul %96, %98, %cst_34 {dimension_numbers = #tpu.dot_dimension_numbers<[1], [0], [0], [1], [0, 0, 1, 1], [], []>} : vector<8x32xbf16>, vector<32x128xbf16>, vector<8x128xf32> -> vector<8x128xf32>
    %c0_35 = arith.constant 0 : index
    %c0_36 = arith.constant 0 : index
    %c0_37 = arith.constant 0 : index
    %100 = vector.load %arg7[%c0_35, %c0_36, %c0_37] : memref<1x1x128xf32, #tpu.memory_space<vmem>>, vector<1x1x128xf32>
    %101 = vector.shape_cast %100 : vector<1x1x128xf32> to vector<1x128xf32>
    %102 = vector.broadcast %101 : vector<1x128xf32> to vector<8x128xf32>
    %103 = arith.addf %99, %102 : vector<8x128xf32>
    %cst_38 = arith.constant 0.000000e+00 : f32
    %104 = vector.broadcast %cst_38 : f32 to vector<8x128xf32>
    %105 = arith.maximumf %103, %104 : vector<8x128xf32>
    %106 = arith.truncf %105 : vector<8x128xf32> to vector<8x128xbf16>
    %c0_39 = arith.constant 0 : index
    %c0_40 = arith.constant 0 : index
    %c0_41 = arith.constant 0 : index
    %107 = vector.load %arg8[%c0_39, %c0_40, %c0_41] : memref<1x128x32xbf16, #tpu.memory_space<vmem>>, vector<1x128x32xbf16>
    %108 = vector.shape_cast %107 : vector<1x128x32xbf16> to vector<128x32xbf16>
    %cst_42 = arith.constant dense<0.000000e+00> : vector<8x32xf32>
    %109 = tpu.matmul %106, %108, %cst_42 {dimension_numbers = #tpu.dot_dimension_numbers<[1], [0], [0], [1], [0, 0, 1, 1], [], []>} : vector<8x128xbf16>, vector<128x32xbf16>, vector<8x32xf32> -> vector<8x32xf32>
    %c0_43 = arith.constant 0 : index
    %c0_44 = arith.constant 0 : index
    %c0_45 = arith.constant 0 : index
    %110 = vector.load %arg9[%c0_43, %c0_44, %c0_45] : memref<1x1x32xf32, #tpu.memory_space<vmem>>, vector<1x1x32xf32>
    %111 = vector.shape_cast %110 : vector<1x1x32xf32> to vector<1x32xf32>
    %112 = vector.broadcast %111 : vector<1x32xf32> to vector<8x32xf32>
    %113 = arith.addf %109, %112 : vector<8x32xf32>
    %114 = arith.addf %113, %95 : vector<8x32xf32>
    %c0_46 = arith.constant 0 : index
    %c0_47 = arith.constant 0 : index
    %c0_48 = arith.constant 0 : index
    %115 = vector.load %arg12[%c0_46, %c0_47, %c0_48] : memref<1x1x32xf32, #tpu.memory_space<vmem>>, vector<1x1x32xf32>
    %116 = vector.shape_cast %115 : vector<1x1x32xf32> to vector<1x32xf32>
    %c0_49 = arith.constant 0 : index
    %c0_50 = arith.constant 0 : index
    %c0_51 = arith.constant 0 : index
    %117 = vector.load %arg13[%c0_49, %c0_50, %c0_51] : memref<1x1x32xf32, #tpu.memory_space<vmem>>, vector<1x1x32xf32>
    %118 = vector.shape_cast %117 : vector<1x1x32xf32> to vector<1x32xf32>
    %cst_52 = arith.constant dense<0.000000e+00> : vector<8xf32>
    %119 = vector.multi_reduction <add>, %114, %cst_52 [1] : vector<8x32xf32> to vector<8xf32>
    %120 = vector.shape_cast %119 : vector<8xf32> to vector<8x1xf32>
    %cst_53 = arith.constant 3.200000e+01 : f32
    %121 = vector.broadcast %cst_53 : f32 to vector<8x1xf32>
    %122 = arith.divf %120, %121 : vector<8x1xf32>
    %123 = vector.broadcast %122 : vector<8x1xf32> to vector<8x32xf32>
    %124 = arith.subf %114, %123 : vector<8x32xf32>
    %125 = arith.mulf %124, %124 : vector<8x32xf32>
    %cst_54 = arith.constant dense<0.000000e+00> : vector<8xf32>
    %126 = vector.multi_reduction <add>, %125, %cst_54 [1] : vector<8x32xf32> to vector<8xf32>
    %127 = vector.shape_cast %126 : vector<8xf32> to vector<8x1xf32>
    %cst_55 = arith.constant 3.200000e+01 : f32
    %128 = vector.broadcast %cst_55 : f32 to vector<8x1xf32>
    %129 = arith.divf %127, %128 : vector<8x1xf32>
    %130 = vector.broadcast %122 : vector<8x1xf32> to vector<8x32xf32>
    %131 = arith.subf %114, %130 : vector<8x32xf32>
    %cst_56 = arith.constant 9.99999974E-6 : f32
    %132 = vector.broadcast %cst_56 : f32 to vector<8x1xf32>
    %133 = arith.addf %129, %132 : vector<8x1xf32>
    %134 = math.rsqrt %133 : vector<8x1xf32>
    %135 = vector.broadcast %134 : vector<8x1xf32> to vector<8x32xf32>
    %136 = arith.mulf %131, %135 : vector<8x32xf32>
    %137 = vector.broadcast %116 : vector<1x32xf32> to vector<8x32xf32>
    %138 = arith.mulf %136, %137 : vector<8x32xf32>
    %139 = vector.broadcast %118 : vector<1x32xf32> to vector<8x32xf32>
    %140 = arith.addf %138, %139 : vector<8x32xf32>
    %c0_57 = arith.constant 0 : index
    %c0_58 = arith.constant 0 : index
    %141 = vector.load %arg19[%c0_57, %c0_58] : memref<8x32xf32, #tpu.memory_space<vmem>>, vector<8x32xf32>
    tpu.vector_store %arg19[%c0_57, %c0_58], %140 {strides = array<i32>} : memref<8x32xf32, #tpu.memory_space<vmem>>, vector<8x32xf32>,
    %c1_i32 = arith.constant 1 : i32
    %142 = arith.cmpi eq, %arg1, %c1_i32 : i32
    %143 = arith.extui %142 : i1 to i32
    %c0_i32_59 = arith.constant 0 : i32
    %144 = arith.cmpi ne, %143, %c0_i32_59 : i32
    scf.if %144 {
      %c0_60 = arith.constant 0 : index
      %c0_61 = arith.constant 0 : index
      %145 = vector.load %arg14[%c0_60, %c0_61] : memref<1x32xf32, #tpu.memory_space<vmem>>, vector<1x32xf32>
      %c0_62 = arith.constant 0 : index
      %c0_63 = arith.constant 0 : index
      %146 = vector.load %arg15[%c0_62, %c0_63] : memref<1x32xf32, #tpu.memory_space<vmem>>, vector<1x32xf32>
      %cst_64 = arith.constant dense<0.000000e+00> : vector<8xf32>
      %147 = vector.multi_reduction <add>, %140, %cst_64 [1] : vector<8x32xf32> to vector<8xf32>
      %148 = vector.shape_cast %147 : vector<8xf32> to vector<8x1xf32>
      %cst_65 = arith.constant 3.200000e+01 : f32
      %149 = vector.broadcast %cst_65 : f32 to vector<8x1xf32>
      %150 = arith.divf %148, %149 : vector<8x1xf32>
      %151 = vector.broadcast %150 : vector<8x1xf32> to vector<8x32xf32>
      %152 = arith.subf %140, %151 : vector<8x32xf32>
      %153 = arith.mulf %152, %152 : vector<8x32xf32>
      %cst_66 = arith.constant dense<0.000000e+00> : vector<8xf32>
      %154 = vector.multi_reduction <add>, %153, %cst_66 [1] : vector<8x32xf32> to vector<8xf32>
      %155 = vector.shape_cast %154 : vector<8xf32> to vector<8x1xf32>
      %cst_67 = arith.constant 3.200000e+01 : f32
      %156 = vector.broadcast %cst_67 : f32 to vector<8x1xf32>
      %157 = arith.divf %155, %156 : vector<8x1xf32>
      %158 = vector.broadcast %150 : vector<8x1xf32> to vector<8x32xf32>
      %159 = arith.subf %140, %158 : vector<8x32xf32>
      %cst_68 = arith.constant 9.99999974E-6 : f32
      %160 = vector.broadcast %cst_68 : f32 to vector<8x1xf32>
      %161 = arith.addf %157, %160 : vector<8x1xf32>
      %162 = math.rsqrt %161 : vector<8x1xf32>
      %163 = vector.broadcast %162 : vector<8x1xf32> to vector<8x32xf32>
      %164 = arith.mulf %159, %163 : vector<8x32xf32>
      %165 = vector.broadcast %145 : vector<1x32xf32> to vector<8x32xf32>
      %166 = arith.mulf %164, %165 : vector<8x32xf32>
      %167 = vector.broadcast %146 : vector<1x32xf32> to vector<8x32xf32>
      %168 = arith.addf %166, %167 : vector<8x32xf32>
      %169 = arith.truncf %168 : vector<8x32xf32> to vector<8x32xbf16>
      %c0_69 = arith.constant 0 : index
      %c0_70 = arith.constant 0 : index
      %170 = vector.load %arg16[%c0_69, %c0_70] : memref<32x128xbf16, #tpu.memory_space<vmem>>, vector<32x128xbf16>
      %cst_71 = arith.constant dense<0.000000e+00> : vector<8x128xf32>
      %171 = tpu.matmul %169, %170, %cst_71 {dimension_numbers = #tpu.dot_dimension_numbers<[1], [0], [0], [1], [0, 0, 1, 1], [], []>} : vector<8x32xbf16>, vector<32x128xbf16>, vector<8x128xf32> -> vector<8x128xf32>
      %c0_72 = arith.constant 0 : index
      %c0_73 = arith.constant 0 : index
      %172 = vector.load %arg17[%c0_72, %c0_73] : memref<1x128xf32, #tpu.memory_space<vmem>>, vector<1x128xf32>
      %173 = vector.broadcast %172 : vector<1x128xf32> to vector<8x128xf32>
      %174 = arith.addf %171, %173 : vector<8x128xf32>
      %c0_74 = arith.constant 0 : index
      %c0_75 = arith.constant 0 : index
      %c0_76 = arith.constant 0 : index
      %175 = vector.load %arg18[%c0_74, %c0_75, %c0_76] : memref<1x8x128xf32, #tpu.memory_space<vmem>>, vector<1x8x128xf32>
      %176 = vector.shape_cast %175 : vector<1x8x128xf32> to vector<8x128xf32>
      %177 = vector.shape_cast %174 : vector<8x128xf32> to vector<1x8x128xf32>
      tpu.vector_store %arg18[%c0_74, %c0_75, %c0_76], %177 {strides = array<i32>} : memref<1x8x128xf32, #tpu.memory_space<vmem>>, vector<1x8x128xf32>,
    } else {
    }
    return
  }
  func.func @transform_0(%arg0: i32, %arg1: i32) -> (i32, i32, i32) {
    %c0_i32 = arith.constant 0 : i32
    %c0_i32_0 = arith.constant 0 : i32
    %c0_i32_1 = arith.constant 0 : i32
    return %arg0, %c0_i32, %c0_i32_0 : i32, i32, i32
  }
  func.func @transform_1(%arg0: i32, %arg1: i32) -> (i32, i32, i32) {
    %c0_i32 = arith.constant 0 : i32
    %c0_i32_0 = arith.constant 0 : i32
    %c0_i32_1 = arith.constant 0 : i32
    return %arg1, %c0_i32, %c0_i32_0 : i32, i32, i32
  }
  func.func @transform_2(%arg0: i32, %arg1: i32) -> (i32, i32, i32, i32) {
    %c0_i32 = arith.constant 0 : i32
    %c0_i32_0 = arith.constant 0 : i32
    %c0_i32_1 = arith.constant 0 : i32
    %c0_i32_2 = arith.constant 0 : i32
    return %arg1, %c0_i32, %c0_i32_0, %c0_i32_1 : i32, i32, i32, i32
  }
  func.func @transform_3(%arg0: i32, %arg1: i32) -> (i32, i32, i32) {
    %c0_i32 = arith.constant 0 : i32
    %c0_i32_0 = arith.constant 0 : i32
    %c0_i32_1 = arith.constant 0 : i32
    return %arg1, %c0_i32, %c0_i32_0 : i32, i32, i32
  }
  func.func @transform_4(%arg0: i32, %arg1: i32) -> (i32, i32, i32) {
    %c0_i32 = arith.constant 0 : i32
    %c0_i32_0 = arith.constant 0 : i32
    %c0_i32_1 = arith.constant 0 : i32
    return %arg1, %c0_i32, %c0_i32_0 : i32, i32, i32
  }
  func.func @transform_5(%arg0: i32, %arg1: i32) -> (i32, i32, i32) {
    %c0_i32 = arith.constant 0 : i32
    %c0_i32_0 = arith.constant 0 : i32
    %c0_i32_1 = arith.constant 0 : i32
    return %arg1, %c0_i32, %c0_i32_0 : i32, i32, i32
  }
  func.func @transform_6(%arg0: i32, %arg1: i32) -> (i32, i32, i32) {
    %c0_i32 = arith.constant 0 : i32
    %c0_i32_0 = arith.constant 0 : i32
    %c0_i32_1 = arith.constant 0 : i32
    return %arg1, %c0_i32, %c0_i32_0 : i32, i32, i32
  }
  func.func @transform_7(%arg0: i32, %arg1: i32) -> (i32, i32, i32) {
    %c0_i32 = arith.constant 0 : i32
    %c0_i32_0 = arith.constant 0 : i32
    %c0_i32_1 = arith.constant 0 : i32
    return %arg1, %c0_i32, %c0_i32_0 : i32, i32, i32
  }
  func.func @transform_8(%arg0: i32, %arg1: i32) -> (i32, i32, i32) {
    %c0_i32 = arith.constant 0 : i32
    %c0_i32_0 = arith.constant 0 : i32
    %c0_i32_1 = arith.constant 0 : i32
    return %arg1, %c0_i32, %c0_i32_0 : i32, i32, i32
  }
  func.func @transform_9(%arg0: i32, %arg1: i32) -> (i32, i32, i32) {
    %c0_i32 = arith.constant 0 : i32
    %c0_i32_0 = arith.constant 0 : i32
    %c0_i32_1 = arith.constant 0 : i32
    return %arg1, %c0_i32, %c0_i32_0 : i32, i32, i32
  }
  func.func @transform_10(%arg0: i32, %arg1: i32) -> (i32, i32, i32) {
    %c0_i32 = arith.constant 0 : i32
    %c0_i32_0 = arith.constant 0 : i32
    %c0_i32_1 = arith.constant 0 : i32
    return %arg1, %c0_i32, %c0_i32_0 : i32, i32, i32
  }
  func.func @transform_11(%arg0: i32, %arg1: i32) -> (i32, i32, i32) {
    %c0_i32 = arith.constant 0 : i32
    %c0_i32_0 = arith.constant 0 : i32
    %c0_i32_1 = arith.constant 0 : i32
    return %arg1, %c0_i32, %c0_i32_0 : i32, i32, i32
  }
  func.func @transform_12(%arg0: i32, %arg1: i32) -> (i32, i32) {
    %c0_i32 = arith.constant 0 : i32
    %c0_i32_0 = arith.constant 0 : i32
    %c0_i32_1 = arith.constant 0 : i32
    return %c0_i32, %c0_i32_0 : i32, i32
  }
  func.func @transform_13(%arg0: i32, %arg1: i32) -> (i32, i32) {
    %c0_i32 = arith.constant 0 : i32
    %c0_i32_0 = arith.constant 0 : i32
    %c0_i32_1 = arith.constant 0 : i32
    return %c0_i32, %c0_i32_0 : i32, i32
  }
  func.func @transform_14(%arg0: i32, %arg1: i32) -> (i32, i32) {
    %c0_i32 = arith.constant 0 : i32
    %c0_i32_0 = arith.constant 0 : i32
    %c0_i32_1 = arith.constant 0 : i32
    return %c0_i32, %c0_i32_0 : i32, i32
  }
  func.func @transform_15(%arg0: i32, %arg1: i32) -> (i32, i32) {
    %c0_i32 = arith.constant 0 : i32
    %c0_i32_0 = arith.constant 0 : i32
    %c0_i32_1 = arith.constant 0 : i32
    return %c0_i32, %c0_i32_0 : i32, i32
  }
  func.func @transform_16(%arg0: i32, %arg1: i32) -> (i32, i32, i32) {
    %c0_i32 = arith.constant 0 : i32
    %c0_i32_0 = arith.constant 0 : i32
    %c0_i32_1 = arith.constant 0 : i32
    return %arg0, %c0_i32, %c0_i32_0 : i32, i32, i32
  }
}

</mosaic_0001>

<llo_original>
// kernel: tpu_custom_call.1
$region0: #{tpu_custom_call.1}
  #allocation0 [shape = 'u32[]', space=smem, size = 0x4, offset = 0x4, fixed_abs, tag = 'smem constant byte address 0x4 - core index']
  #allocation1 [shape = 'u32[144,128]{1,0:T(1,128)}', space=vmem, size = 0x12000, scoped, tag = 'internal scratch']
  #allocation2 [shape = 'f32[8,32]{1,0:T(8,128)}', space=vmem, size = 0x1000, scoped, tag = 'scratch operand']
  %s0 = inlined_call_operand.vmem [shape: f32[2,8,32], index: 0, kind: input, shape index: {}]
  %s1 = inlined_call_operand.vmem [shape: bf16[2,32,96], index: 1, kind: input, shape index: {}]
  %s2 = inlined_call_operand.vmem [shape: bf16[2,4,8,32], index: 2, kind: input, shape index: {}]
  %s3 = inlined_call_operand.vmem [shape: f32[2,1,32], index: 3, kind: input, shape index: {}]
  %s4 = inlined_call_operand.vmem [shape: bf16[2,32,128], index: 4, kind: input, shape index: {}]
  %s5 = inlined_call_operand.vmem [shape: f32[2,1,128], index: 5, kind: input, shape index: {}]
  %s6 = inlined_call_operand.vmem [shape: bf16[2,128,32], index: 6, kind: input, shape index: {}]
  %s7 = inlined_call_operand.vmem [shape: f32[2,1,32], index: 7, kind: input, shape index: {}]
  %s8 = inlined_call_operand.vmem [shape: f32[2,1,32], index: 8, kind: input, shape index: {}]
  %s9 = inlined_call_operand.vmem [shape: f32[2,1,32], index: 9, kind: input, shape index: {}]
  %s10 = inlined_call_operand.vmem [shape: f32[2,1,32], index: 10, kind: input, shape index: {}]
  %s11 = inlined_call_operand.vmem [shape: f32[2,1,32], index: 11, kind: input, shape index: {}]
  %s12 = inlined_call_operand.vmem [shape: f32[1,32], index: 12, kind: input, shape index: {}]
  %s13 = inlined_call_operand.vmem [shape: f32[1,32], index: 13, kind: input, shape index: {}]
  %s14 = inlined_call_operand.vmem [shape: bf16[32,128], index: 14, kind: input, shape index: {}]
  %s15 = inlined_call_operand.vmem [shape: f32[1,128], index: 15, kind: input, shape index: {}]
  %s16 = inlined_call_operand.hbm [shape: f32[2,8,128], index: 16, kind: output, shape index: {}]
  %s17 = sld [smem:[#allocation0]]
  $region105: #{tpu_custom_call.1} parent=0
    _
  %s19 = ssub.s32 1, %s17
  %s20 = scalar_select 0, %s19, %s17
  $region1: #{tpu_custom_call.1} parent=0
    #allocation3 [shape = 'u8[8192]{0}', space=vmem, size = 0x2000, scoped, tag = 'output window, operand 0']
    #allocation4 [shape = 's32[2]{0}', space=sflag, size = 0x8, scoped, tag = 'scoped memory for tpu_custom_call.1']
    %21 = vsyncpa [#allocation4], 0
    %s22 = scalar_lea.sflag [#allocation4], 1
    %23 = vsyncpa %s22, 0
    loop: start=0, step=1, limit=6
    $region2: #{tpu_custom_call.1} parent=1 // loop_pre_header
      _
    $region3: #{tpu_custom_call.1} parent=1 // loop_header
      %s25 = sphi 0, %s29
      %p26 = scmp.ge.s32.totalorder %s25, 6
      %s32 = sphi 0, %s44
      %s33 = sphi 0, %s40
      %s34 = sphi 0, %s32
      %s35 = sphi 0, %s33
      %s36 = sphi 0, %s34
      %s37 = sphi 0, %s35
      %s47 = sphi 0, %s49
      %s50 = sphi 0, %s47
      %s51 = sphi 0, %s50
      %s67 = sphi 0, %s51
      %s73 = sphi 0, %s75
      %s76 = sphi 0, %s73
      %s77 = sphi 0, %s76
      %s93 = sphi 0, %s77
      %s99 = sphi 0, %s101
      %s102 = sphi 0, %s99
      %s103 = sphi 0, %s102
      %s119 = sphi 0, %s103
      %s125 = sphi 0, %s127
      %s128 = sphi 0, %s125
      %s129 = sphi 0, %s128
      %s145 = sphi 0, %s129
      %s151 = sphi 0, %s153
      %s154 = sphi 0, %s151
      %s155 = sphi 0, %s154
      %s171 = sphi 0, %s155
      %s177 = sphi 0, %s179
      %s180 = sphi 0, %s177
      %s181 = sphi 0, %s180
      %s197 = sphi 0, %s181
      %s203 = sphi 0, %s205
      %s206 = sphi 0, %s203
      %s207 = sphi 0, %s206
      %s223 = sphi 0, %s207
      %s229 = sphi 0, %s231
      %s232 = sphi 0, %s229
      %s233 = sphi 0, %s232
      %s249 = sphi 0, %s233
      %s255 = sphi 0, %s257
      %s258 = sphi 0, %s255
      %s259 = sphi 0, %s258
      %s275 = sphi 0, %s259
      %s281 = sphi 0, %s283
      %s284 = sphi 0, %s281
      %s285 = sphi 0, %s284
      %s301 = sphi 0, %s285
      %s307 = sphi 0, %s309
      %s310 = sphi 0, %s307
      %s311 = sphi 0, %s310
      %s327 = sphi 0, %s311
      %s333 = sphi 0, %s335
      %s336 = sphi 0, %s333
      %s337 = sphi 0, %s336
      %s353 = sphi 0, %s337
      %s357 = sphi 0, %s357
      %s359 = sphi 0, %s357
      %s360 = sphi 0, %s359
      %s374 = sphi 0, %s360
      %s378 = sphi 0, %s378
      %s380 = sphi 0, %s378
      %s381 = sphi 0, %s380
      %s395 = sphi 0, %s381
      %s399 = sphi 0, %s399
      %s401 = sphi 0, %s399
      %s402 = sphi 0, %s401
      %s416 = sphi 0, %s402
      %s420 = sphi 0, %s420
      %s422 = sphi 0, %s420
      %s423 = sphi 0, %s422
      %s437 = sphi 0, %s423
      %s443 = sphi 0, %s445
      %s446 = sphi 0, %s443
      %s447 = sphi 0, %s446
      %s463 = sphi 0, %s447
    $region4: #{tpu_custom_call.1} parent=1 // loop_header_branch
      %28 = sbr.rel (%p26) target = $region8
    $region5: #{tpu_custom_call.1} parent=1 // loop_body
      %s30 = ssub.s32 %s25, 1
      %s31 = ssub.s32 %s25, 2
      %s38 = sadd.s32 1, %s33
      %p39 = scmp.ge.s32.totalorder %s38, 2
      %s40 = scalar_select %p39, 0, %s38
      %s41 = sadd.s32 1, %s32
      %s42 = scalar_select %p39, %s41, %s32
      %p43 = scmp.ge.s32.totalorder %s42, 2
      %s44 = scalar_select %p43, 0, %s42
      %s45 = ssub.s32 %s32, %s44
      %p46 = scmp.eq.s32.totalorder %s45, 0
      %s48 = sadd.s32 %s47, 1
      %s49 = scalar_select %p46, %s47, %s48
      %p52 = pneg %p46
      %p53 = scmp.eq.s32.totalorder %s25, 3
      %p54 = por %p52, %p53
      %p55 = scmp.ne.s32.totalorder %s47, %s50
      %p56 = scmp.eq.s32.totalorder %s25, 0
      %p57 = por %p55, %p56
      %p58 = scmp.ne.s32.totalorder %s47, %s50
      %p59 = scmp.eq.s32.totalorder %s30, 3
      %p60 = por %p58, %p59
      %p61 = scmp.ne.s32.totalorder %s50, %s51
      %p62 = scmp.eq.s32.totalorder %s30, 0
      %p63 = por %p61, %p62
      %p64 = scmp.ne.s32.totalorder %s50, %s51
      %p65 = scmp.eq.s32.totalorder %s31, 3
      %p66 = por %p64, %p65
      %p68 = scmp.ne.s32.totalorder %s51, %s67
      %p69 = scmp.eq.s32.totalorder %s31, 0
      %p70 = por %p68, %p69
      %s71 = ssub.s32 %s33, %s40
      %p72 = scmp.eq.s32.totalorder %s71, 0
      %s74 = sadd.s32 %s73, 1
      %s75 = scalar_select %p72, %s73, %s74
      %p78 = pneg %p72
      %p79 = scmp.eq.s32.totalorder %s25, 3
      %p80 = por %p78, %p79
      %p81 = scmp.ne.s32.totalorder %s73, %s76
      %p82 = scmp.eq.s32.totalorder %s25, 0
      %p83 = por %p81, %p82
      %p84 = scmp.ne.s32.totalorder %s73, %s76
      %p85 = scmp.eq.s32.totalorder %s30, 3
      %p86 = por %p84, %p85
      %p87 = scmp.ne.s32.totalorder %s76, %s77
      %p88 = scmp.eq.s32.totalorder %s30, 0
      %p89 = por %p87, %p88
      %p90 = scmp.ne.s32.totalorder %s76, %s77
      %p91 = scmp.eq.s32.totalorder %s31, 3
      %p92 = por %p90, %p91
      %p94 = scmp.ne.s32.totalorder %s77, %s93
      %p95 = scmp.eq.s32.totalorder %s31, 0
      %p96 = por %p94, %p95
      %s97 = ssub.s32 %s33, %s40
      %p98 = scmp.eq.s32.totalorder %s97, 0
      %s100 = sadd.s32 %s99, 1
      %s101 = scalar_select %p98, %s99, %s100
      %p104 = pneg %p98
      %p105 = scmp.eq.s32.totalorder %s25, 3
      %p106 = por %p104, %p105
      %p107 = scmp.ne.s32.totalorder %s99, %s102
      %p108 = scmp.eq.s32.totalorder %s25, 0
      %p109 = por %p107, %p108
      %p110 = scmp.ne.s32.totalorder %s99, %s102
      %p111 = scmp.eq.s32.totalorder %s30, 3
      %p112 = por %p110, %p111
      %p113 = scmp.ne.s32.totalorder %s102, %s103
      %p114 = scmp.eq.s32.totalorder %s30, 0
      %p115 = por %p113, %p114
      %p116 = scmp.ne.s32.totalorder %s102, %s103
      %p117 = scmp.eq.s32.totalorder %s31, 3
      %p118 = por %p116, %p117
      %p120 = scmp.ne.s32.totalorder %s103, %s119
      %p121 = scmp.eq.s32.totalorder %s31, 0
      %p122 = por %p120, %p121
      %s123 = ssub.s32 %s33, %s40
      %p124 = scmp.eq.s32.totalorder %s123, 0
      %s126 = sadd.s32 %s125, 1
      %s127 = scalar_select %p124, %s125, %s126
      %p130 = pneg %p124
      %p131 = scmp.eq.s32.totalorder %s25, 3
      %p132 = por %p130, %p131
      %p133 = scmp.ne.s32.totalorder %s125, %s128
      %p134 = scmp.eq.s32.totalorder %s25, 0
      %p135 = por %p133, %p134
      %p136 = scmp.ne.s32.totalorder %s125, %s128
      %p137 = scmp.eq.s32.totalorder %s30, 3
      %p138 = por %p136, %p137
      %p139 = scmp.ne.s32.totalorder %s128, %s129
      %p140 = scmp.eq.s32.totalorder %s30, 0
      %p141 = por %p139, %p140
      %p142 = scmp.ne.s32.totalorder %s128, %s129
      %p143 = scmp.eq.s32.totalorder %s31, 3
      %p144 = por %p142, %p143
      %p146 = scmp.ne.s32.totalorder %s129, %s145
      %p147 = scmp.eq.s32.totalorder %s31, 0
      %p148 = por %p146, %p147
      %s149 = ssub.s32 %s33, %s40
      %p150 = scmp.eq.s32.totalorder %s149, 0
      %s152 = sadd.s32 %s151, 1
      %s153 = scalar_select %p150, %s151, %s152
      %p156 = pneg %p150
      %p157 = scmp.eq.s32.totalorder %s25, 3
      %p158 = por %p156, %p157
      %p159 = scmp.ne.s32.totalorder %s151, %s154
      %p160 = scmp.eq.s32.totalorder %s25, 0
      %p161 = por %p159, %p160
      %p162 = scmp.ne.s32.totalorder %s151, %s154
      %p163 = scmp.eq.s32.totalorder %s30, 3
      %p164 = por %p162, %p163
      %p165 = scmp.ne.s32.totalorder %s154, %s155
      %p166 = scmp.eq.s32.totalorder %s30, 0
      %p167 = por %p165, %p166
      %p168 = scmp.ne.s32.totalorder %s154, %s155
      %p169 = scmp.eq.s32.totalorder %s31, 3
      %p170 = por %p168, %p169
      %p172 = scmp.ne.s32.totalorder %s155, %s171
      %p173 = scmp.eq.s32.totalorder %s31, 0
      %p174 = por %p172, %p173
      %s175 = ssub.s32 %s33, %s40
      %p176 = scmp.eq.s32.totalorder %s175, 0
      %s178 = sadd.s32 %s177, 1
      %s179 = scalar_select %p176, %s177, %s178
      %p182 = pneg %p176
      %p183 = scmp.eq.s32.totalorder %s25, 3
      %p184 = por %p182, %p183
      %p185 = scmp.ne.s32.totalorder %s177, %s180
      %p186 = scmp.eq.s32.totalorder %s25, 0
      %p187 = por %p185, %p186
      %p188 = scmp.ne.s32.totalorder %s177, %s180
      %p189 = scmp.eq.s32.totalorder %s30, 3
      %p190 = por %p188, %p189
      %p191 = scmp.ne.s32.totalorder %s180, %s181
      %p192 = scmp.eq.s32.totalorder %s30, 0
      %p193 = por %p191, %p192
      %p194 = scmp.ne.s32.totalorder %s180, %s181
      %p195 = scmp.eq.s32.totalorder %s31, 3
      %p196 = por %p194, %p195
      %p198 = scmp.ne.s32.totalorder %s181, %s197
      %p199 = scmp.eq.s32.totalorder %s31, 0
      %p200 = por %p198, %p199
      %s201 = ssub.s32 %s33, %s40
      %p202 = scmp.eq.s32.totalorder %s201, 0
      %s204 = sadd.s32 %s203, 1
      %s205 = scalar_select %p202, %s203, %s204
      %p208 = pneg %p202
      %p209 = scmp.eq.s32.totalorder %s25, 3
      %p210 = por %p208, %p209
      %p211 = scmp.ne.s32.totalorder %s203, %s206
      %p212 = scmp.eq.s32.totalorder %s25, 0
      %p213 = por %p211, %p212
      %p214 = scmp.ne.s32.totalorder %s203, %s206
      %p215 = scmp.eq.s32.totalorder %s30, 3
      %p216 = por %p214, %p215
      %p217 = scmp.ne.s32.totalorder %s206, %s207
      %p218 = scmp.eq.s32.totalorder %s30, 0
      %p219 = por %p217, %p218
      %p220 = scmp.ne.s32.totalorder %s206, %s207
      %p221 = scmp.eq.s32.totalorder %s31, 3
      %p222 = por %p220, %p221
      %p224 = scmp.ne.s32.totalorder %s207, %s223
      %p225 = scmp.eq.s32.totalorder %s31, 0
      %p226 = por %p224, %p225
      %s227 = ssub.s32 %s33, %s40
      %p228 = scmp.eq.s32.totalorder %s227, 0
      %s230 = sadd.s32 %s229, 1
      %s231 = scalar_select %p228, %s229, %s230
      %p234 = pneg %p228
      %p235 = scmp.eq.s32.totalorder %s25, 3
      %p236 = por %p234, %p235
      %p237 = scmp.ne.s32.totalorder %s229, %s232
      %p238 = scmp.eq.s32.totalorder %s25, 0
      %p239 = por %p237, %p238
      %p240 = scmp.ne.s32.totalorder %s229, %s232
      %p241 = scmp.eq.s32.totalorder %s30, 3
      %p242 = por %p240, %p241
      %p243 = scmp.ne.s32.totalorder %s232, %s233
      %p244 = scmp.eq.s32.totalorder %s30, 0
      %p245 = por %p243, %p244
      %p246 = scmp.ne.s32.totalorder %s232, %s233
      %p247 = scmp.eq.s32.totalorder %s31, 3
      %p248 = por %p246, %p247
      %p250 = scmp.ne.s32.totalorder %s233, %s249
      %p251 = scmp.eq.s32.totalorder %s31, 0
      %p252 = por %p250, %p251
      %s253 = ssub.s32 %s33, %s40
      %p254 = scmp.eq.s32.totalorder %s253, 0
      %s256 = sadd.s32 %s255, 1
      %s257 = scalar_select %p254, %s255, %s256
      %p260 = pneg %p254
      %p261 = scmp.eq.s32.totalorder %s25, 3
      %p262 = por %p260, %p261
      %p263 = scmp.ne.s32.totalorder %s255, %s258
      %p264 = scmp.eq.s32.totalorder %s25, 0
      %p265 = por %p263, %p264
      %p266 = scmp.ne.s32.totalorder %s255, %s258
      %p267 = scmp.eq.s32.totalorder %s30, 3
      %p268 = por %p266, %p267
      %p269 = scmp.ne.s32.totalorder %s258, %s259
      %p270 = scmp.eq.s32.totalorder %s30, 0
      %p271 = por %p269, %p270
      %p272 = scmp.ne.s32.totalorder %s258, %s259
      %p273 = scmp.eq.s32.totalorder %s31, 3
      %p274 = por %p272, %p273
      %p276 = scmp.ne.s32.totalorder %s259, %s275
      %p277 = scmp.eq.s32.totalorder %s31, 0
      %p278 = por %p276, %p277
      %s279 = ssub.s32 %s33, %s40
      %p280 = scmp.eq.s32.totalorder %s279, 0
      %s282 = sadd.s32 %s281, 1
      %s283 = scalar_select %p280, %s281, %s282
      %p286 = pneg %p280
      %p287 = scmp.eq.s32.totalorder %s25, 3
      %p288 = por %p286, %p287
      %p289 = scmp.ne.s32.totalorder %s281, %s284
      %p290 = scmp.eq.s32.totalorder %s25, 0
      %p291 = por %p289, %p290
      %p292 = scmp.ne.s32.totalorder %s281, %s284
      %p293 = scmp.eq.s32.totalorder %s30, 3
      %p294 = por %p292, %p293
      %p295 = scmp.ne.s32.totalorder %s284, %s285
      %p296 = scmp.eq.s32.totalorder %s30, 0
      %p297 = por %p295, %p296
      %p298 = scmp.ne.s32.totalorder %s284, %s285
      %p299 = scmp.eq.s32.totalorder %s31, 3
      %p300 = por %p298, %p299
      %p302 = scmp.ne.s32.totalorder %s285, %s301
      %p303 = scmp.eq.s32.totalorder %s31, 0
      %p304 = por %p302, %p303
      %s305 = ssub.s32 %s33, %s40
      %p306 = scmp.eq.s32.totalorder %s305, 0
      %s308 = sadd.s32 %s307, 1
      %s309 = scalar_select %p306, %s307, %s308
      %p312 = pneg %p306
      %p313 = scmp.eq.s32.totalorder %s25, 3
      %p314 = por %p312, %p313
      %p315 = scmp.ne.s32.totalorder %s307, %s310
      %p316 = scmp.eq.s32.totalorder %s25, 0
      %p317 = por %p315, %p316
      %p318 = scmp.ne.s32.totalorder %s307, %s310
      %p319 = scmp.eq.s32.totalorder %s30, 3
      %p320 = por %p318, %p319
      %p321 = scmp.ne.s32.totalorder %s310, %s311
      %p322 = scmp.eq.s32.totalorder %s30, 0
      %p323 = por %p321, %p322
      %p324 = scmp.ne.s32.totalorder %s310, %s311
      %p325 = scmp.eq.s32.totalorder %s31, 3
      %p326 = por %p324, %p325
      %p328 = scmp.ne.s32.totalorder %s311, %s327
      %p329 = scmp.eq.s32.totalorder %s31, 0
      %p330 = por %p328, %p329
      %s331 = ssub.s32 %s33, %s40
      %p332 = scmp.eq.s32.totalorder %s331, 0
      %s334 = sadd.s32 %s333, 1
      %s335 = scalar_select %p332, %s333, %s334
      %p338 = pneg %p332
      %p339 = scmp.eq.s32.totalorder %s25, 3
      %p340 = por %p338, %p339
      %p341 = scmp.ne.s32.totalorder %s333, %s336
      %p342 = scmp.eq.s32.totalorder %s25, 0
      %p343 = por %p341, %p342
      %p344 = scmp.ne.s32.totalorder %s333, %s336
      %p345 = scmp.eq.s32.totalorder %s30, 3
      %p346 = por %p344, %p345
      %p347 = scmp.ne.s32.totalorder %s336, %s337
      %p348 = scmp.eq.s32.totalorder %s30, 0
      %p349 = por %p347, %p348
      %p350 = scmp.ne.s32.totalorder %s336, %s337
      %p351 = scmp.eq.s32.totalorder %s31, 3
      %p352 = por %p350, %p351
      %p354 = scmp.ne.s32.totalorder %s337, %s353
      %p355 = scmp.eq.s32.totalorder %s31, 0
      %p356 = por %p354, %p355
      %s358 = sadd.s32 %s357, 1
      %p361 = scmp.eq.s32.totalorder %s25, 3
      %p362 = scmp.ne.s32.totalorder %s357, %s359
      %p363 = scmp.eq.s32.totalorder %s25, 0
      %p364 = por %p362, %p363
      %p365 = scmp.ne.s32.totalorder %s357, %s359
      %p366 = scmp.eq.s32.totalorder %s30, 3
      %p367 = por %p365, %p366
      %p368 = scmp.ne.s32.totalorder %s359, %s360
      %p369 = scmp.eq.s32.totalorder %s30, 0
      %p370 = por %p368, %p369
      %p371 = scmp.ne.s32.totalorder %s359, %s360
      %p372 = scmp.eq.s32.totalorder %s31, 3
      %p373 = por %p371, %p372
      %p375 = scmp.ne.s32.totalorder %s360, %s374
      %p376 = scmp.eq.s32.totalorder %s31, 0
      %p377 = por %p375, %p376
      %s379 = sadd.s32 %s378, 1
      %p382 = scmp.eq.s32.totalorder %s25, 3
      %p383 = scmp.ne.s32.totalorder %s378, %s380
      %p384 = scmp.eq.s32.totalorder %s25, 0
      %p385 = por %p383, %p384
      %p386 = scmp.ne.s32.totalorder %s378, %s380
      %p387 = scmp.eq.s32.totalorder %s30, 3
      %p388 = por %p386, %p387
      %p389 = scmp.ne.s32.totalorder %s380, %s381
      %p390 = scmp.eq.s32.totalorder %s30, 0
      %p391 = por %p389, %p390
      %p392 = scmp.ne.s32.totalorder %s380, %s381
      %p393 = scmp.eq.s32.totalorder %s31, 3
      %p394 = por %p392, %p393
      %p396 = scmp.ne.s32.totalorder %s381, %s395
      %p397 = scmp.eq.s32.totalorder %s31, 0
      %p398 = por %p396, %p397
      %s400 = sadd.s32 %s399, 1
      %p403 = scmp.eq.s32.totalorder %s25, 3
      %p404 = scmp.ne.s32.totalorder %s399, %s401
      %p405 = scmp.eq.s32.totalorder %s25, 0
      %p406 = por %p404, %p405
      %p407 = scmp.ne.s32.totalorder %s399, %s401
      %p408 = scmp.eq.s32.totalorder %s30, 3
      %p409 = por %p407, %p408
      %p410 = scmp.ne.s32.totalorder %s401, %s402
      %p411 = scmp.eq.s32.totalorder %s30, 0
      %p412 = por %p410, %p411
      %p413 = scmp.ne.s32.totalorder %s401, %s402
      %p414 = scmp.eq.s32.totalorder %s31, 3
      %p415 = por %p413, %p414
      %p417 = scmp.ne.s32.totalorder %s402, %s416
      %p418 = scmp.eq.s32.totalorder %s31, 0
      %p419 = por %p417, %p418
      %s421 = sadd.s32 %s420, 1
      %p424 = scmp.eq.s32.totalorder %s25, 3
      %p425 = scmp.ne.s32.totalorder %s420, %s422
      %p426 = scmp.eq.s32.totalorder %s25, 0
      %p427 = por %p425, %p426
      %p428 = scmp.ne.s32.totalorder %s420, %s422
      %p429 = scmp.eq.s32.totalorder %s30, 3
      %p430 = por %p428, %p429
      %p431 = scmp.ne.s32.totalorder %s422, %s423
      %p432 = scmp.eq.s32.totalorder %s30, 0
      %p433 = por %p431, %p432
      %p434 = scmp.ne.s32.totalorder %s422, %s423
      %p435 = scmp.eq.s32.totalorder %s31, 3
      %p436 = por %p434, %p435
      %p438 = scmp.ne.s32.totalorder %s423, %s437
      %p439 = scmp.eq.s32.totalorder %s31, 0
      %p440 = por %p438, %p439
      %s441 = ssub.s32 %s32, %s44
      %p442 = scmp.eq.s32.totalorder %s441, 0
      %s444 = sadd.s32 %s443, 1
      %s445 = scalar_select %p442, %s443, %s444
      %p448 = pneg %p442
      %p449 = scmp.eq.s32.totalorder %s25, 3
      %p450 = por %p448, %p449
      %p451 = scmp.ne.s32.totalorder %s443, %s446
      %p452 = scmp.eq.s32.totalorder %s25, 0
      %p453 = por %p451, %p452
      %p454 = scmp.ne.s32.totalorder %s443, %s446
      %p455 = scmp.eq.s32.totalorder %s30, 3
      %p456 = por %p454, %p455
      %p457 = scmp.ne.s32.totalorder %s446, %s447
      %p458 = scmp.eq.s32.totalorder %s30, 0
      %p459 = por %p457, %p458
      %p460 = scmp.ne.s32.totalorder %s446, %s447
      %p461 = scmp.eq.s32.totalorder %s31, 3
      %p462 = por %p460, %p461
      %p464 = scmp.ne.s32.totalorder %s447, %s463
      %p465 = scmp.eq.s32.totalorder %s31, 0
      %p466 = por %p464, %p465
      %p467 = scmp.le.s32.totalorder 1, %s25
      %p468 = scmp.lt.s32.totalorder %s25, 5
      %p469 = pnand %p467, %p468
      %p470 = pneg %p469
      // Predicated region
      $region9: #{tpu_custom_call.1} parent=5 // pred_check
        _
      $region10: #{tpu_custom_call.1} parent=5 // pred_check_branch
        %472 = sbr.rel (%p469) target = $region12
      $region11: #{tpu_custom_call.1} parent=5 // pred_region
        %s473 = ssub.s32 %s25, 1
        // Predicated region
        $region13: #{tpu_custom_call.1} parent=11 // pred_check
          %p474 = pneg %p370
        $region14: #{tpu_custom_call.1} parent=11 // pred_check_branch
          %476 = sbr.rel (%p474) target = $region16
        $region15: #{tpu_custom_call.1} parent=11 // pred_region
          _
        $region16: #{tpu_custom_call.1} parent=11 // pred_fallthru
          _
        // Predicated region
        $region17: #{tpu_custom_call.1} parent=11 // pred_check
          %p477 = pneg %p391
        $region18: #{tpu_custom_call.1} parent=11 // pred_check_branch
          %479 = sbr.rel (%p477) target = $region20
        $region19: #{tpu_custom_call.1} parent=11 // pred_region
          _
        $region20: #{tpu_custom_call.1} parent=11 // pred_fallthru
          _
        // Predicated region
        $region21: #{tpu_custom_call.1} parent=11 // pred_check
          %p480 = pneg %p412
        $region22: #{tpu_custom_call.1} parent=11 // pred_check_branch
          %482 = sbr.rel (%p480) target = $region24
        $region23: #{tpu_custom_call.1} parent=11 // pred_region
          _
        $region24: #{tpu_custom_call.1} parent=11 // pred_fallthru
          _
        // Predicated region
        $region25: #{tpu_custom_call.1} parent=11 // pred_check
          %p483 = pneg %p433
        $region26: #{tpu_custom_call.1} parent=11 // pred_check_branch
          %485 = sbr.rel (%p483) target = $region28
        $region27: #{tpu_custom_call.1} parent=11 // pred_region
          _
        $region28: #{tpu_custom_call.1} parent=11 // pred_fallthru
          _
      $region12: #{tpu_custom_call.1} parent=5 // pred_fallthru
        _
      %p486 = scmp.lt.s32.totalorder %s25, 4
      // Predicated region
      $region29: #{tpu_custom_call.1} parent=5 // pred_check
        %p487 = pneg %p486
      $region30: #{tpu_custom_call.1} parent=5 // pred_check_branch
        %489 = sbr.rel (%p487) target = $region32
      $region31: #{tpu_custom_call.1} parent=5 // pred_region
        // Predicated region
        $region33: #{tpu_custom_call.1} parent=31 // pred_check
          %p490 = pneg %p57
        $region34: #{tpu_custom_call.1} parent=31 // pred_check_branch
          %492 = sbr.rel (%p490) target = $region36
        $region35: #{tpu_custom_call.1} parent=31 // pred_region
          %p493 = scmp.lt.s32.totalorder %s32, 1
          %s494 = scalar_select %p493, %s32, 1
          %s495 = smul.addr %s494, 8
          %s496 = scalar_lea.vmem %s0, %s495
        $region36: #{tpu_custom_call.1} parent=31 // pred_fallthru
          _
        // Predicated region
        $region37: #{tpu_custom_call.1} parent=31 // pred_check
          %p497 = pneg %p83
        $region38: #{tpu_custom_call.1} parent=31 // pred_check_branch
          %499 = sbr.rel (%p497) target = $region40
        $region39: #{tpu_custom_call.1} parent=31 // pred_region
          %p500 = scmp.lt.s32.totalorder %s33, 1
          %s501 = scalar_select %p500, %s33, 1
          %s502 = smul.addr %s501, 4
          %s503 = smul.addr %s502, 4
          %s504 = scalar_lea.vmem %s1, %s503
        $region40: #{tpu_custom_call.1} parent=31 // pred_fallthru
          _
        // Predicated region
        $region41: #{tpu_custom_call.1} parent=31 // pred_check
          %p505 = pneg %p109
        $region42: #{tpu_custom_call.1} parent=31 // pred_check_branch
          %507 = sbr.rel (%p505) target = $region44
        $region43: #{tpu_custom_call.1} parent=31 // pred_region
          %p508 = scmp.lt.s32.totalorder %s33, 1
          %s509 = scalar_select %p508, %s33, 1
          %s510 = smul.addr %s509, 4
          %s511 = smul.addr %s510, 4
          %s512 = scalar_lea.vmem %s2, %s511
        $region44: #{tpu_custom_call.1} parent=31 // pred_fallthru
          _
        // Predicated region
        $region45: #{tpu_custom_call.1} parent=31 // pred_check
          %p513 = pneg %p135
        $region46: #{tpu_custom_call.1} parent=31 // pred_check_branch
          %515 = sbr.rel (%p513) target = $region48
        $region47: #{tpu_custom_call.1} parent=31 // pred_region
          %p516 = scmp.lt.s32.totalorder %s33, 1
          %s517 = scalar_select %p516, %s33, 1
          %s518 = scalar_lea.vmem %s3, %s517
        $region48: #{tpu_custom_call.1} parent=31 // pred_fallthru
          _
        // Predicated region
        $region49: #{tpu_custom_call.1} parent=31 // pred_check
          %p519 = pneg %p161
        $region50: #{tpu_custom_call.1} parent=31 // pred_check_branch
          %521 = sbr.rel (%p519) target = $region52
        $region51: #{tpu_custom_call.1} parent=31 // pred_region
          %p522 = scmp.lt.s32.totalorder %s33, 1
          %s523 = scalar_select %p522, %s33, 1
          %s524 = smul.addr %s523, 4
          %s525 = smul.addr %s524, 4
          %s526 = scalar_lea.vmem %s4, %s525
        $region52: #{tpu_custom_call.1} parent=31 // pred_fallthru
          _
        // Predicated region
        $region53: #{tpu_custom_call.1} parent=31 // pred_check
          %p527 = pneg %p187
        $region54: #{tpu_custom_call.1} parent=31 // pred_check_branch
          %529 = sbr.rel (%p527) target = $region56
        $region55: #{tpu_custom_call.1} parent=31 // pred_region
          %p530 = scmp.lt.s32.totalorder %s33, 1
          %s531 = scalar_select %p530, %s33, 1
          %s532 = scalar_lea.vmem %s5, %s531
        $region56: #{tpu_custom_call.1} parent=31 // pred_fallthru
          _
        // Predicated region
        $region57: #{tpu_custom_call.1} parent=31 // pred_check
          %p533 = pneg %p213
        $region58: #{tpu_custom_call.1} parent=31 // pred_check_branch
          %535 = sbr.rel (%p533) target = $region60
        $region59: #{tpu_custom_call.1} parent=31 // pred_region
          %p536 = scmp.lt.s32.totalorder %s33, 1
          %s537 = scalar_select %p536, %s33, 1
          %s538 = smul.addr %s537, 16
          %s539 = smul.addr %s538, 4
          %s540 = scalar_lea.vmem %s6, %s539
        $region60: #{tpu_custom_call.1} parent=31 // pred_fallthru
          _
        // Predicated region
        $region61: #{tpu_custom_call.1} parent=31 // pred_check
          %p541 = pneg %p239
        $region62: #{tpu_custom_call.1} parent=31 // pred_check_branch
          %543 = sbr.rel (%p541) target = $region64
        $region63: #{tpu_custom_call.1} parent=31 // pred_region
          %p544 = scmp.lt.s32.totalorder %s33, 1
          %s545 = scalar_select %p544, %s33, 1
          %s546 = scalar_lea.vmem %s7, %s545
        $region64: #{tpu_custom_call.1} parent=31 // pred_fallthru
          _
        // Predicated region
        $region65: #{tpu_custom_call.1} parent=31 // pred_check
          %p547 = pneg %p265
        $region66: #{tpu_custom_call.1} parent=31 // pred_check_branch
          %549 = sbr.rel (%p547) target = $region68
        $region67: #{tpu_custom_call.1} parent=31 // pred_region
          %p550 = scmp.lt.s32.totalorder %s33, 1
          %s551 = scalar_select %p550, %s33, 1
          %s552 = scalar_lea.vmem %s8, %s551
        $region68: #{tpu_custom_call.1} parent=31 // pred_fallthru
          _
        // Predicated region
        $region69: #{tpu_custom_call.1} parent=31 // pred_check
          %p553 = pneg %p291
        $region70: #{tpu_custom_call.1} parent=31 // pred_check_branch
          %555 = sbr.rel (%p553) target = $region72
        $region71: #{tpu_custom_call.1} parent=31 // pred_region
          %p556 = scmp.lt.s32.totalorder %s33, 1
          %s557 = scalar_select %p556, %s33, 1
          %s558 = scalar_lea.vmem %s9, %s557
        $region72: #{tpu_custom_call.1} parent=31 // pred_fallthru
          _
        // Predicated region
        $region73: #{tpu_custom_call.1} parent=31 // pred_check
          %p559 = pneg %p317
        $region74: #{tpu_custom_call.1} parent=31 // pred_check_branch
          %561 = sbr.rel (%p559) target = $region76
        $region75: #{tpu_custom_call.1} parent=31 // pred_region
          %p562 = scmp.lt.s32.totalorder %s33, 1
          %s563 = scalar_select %p562, %s33, 1
          %s564 = scalar_lea.vmem %s10, %s563
        $region76: #{tpu_custom_call.1} parent=31 // pred_fallthru
          _
        // Predicated region
        $region77: #{tpu_custom_call.1} parent=31 // pred_check
          %p565 = pneg %p343
        $region78: #{tpu_custom_call.1} parent=31 // pred_check_branch
          %567 = sbr.rel (%p565) target = $region80
        $region79: #{tpu_custom_call.1} parent=31 // pred_region
          %p568 = scmp.lt.s32.totalorder %s33, 1
          %s569 = scalar_select %p568, %s33, 1
          %s570 = scalar_lea.vmem %s11, %s569
        $region80: #{tpu_custom_call.1} parent=31 // pred_fallthru
          _
      $region32: #{tpu_custom_call.1} parent=5 // pred_fallthru
        _
      %p571 = scmp.le.s32.totalorder 1, %s25
      %p572 = scmp.lt.s32.totalorder %s25, 5
      %p573 = pnand %p571, %p572
      %p574 = pneg %p573
      // Predicated region
      $region81: #{tpu_custom_call.1} parent=5 // pred_check
        _
      $region82: #{tpu_custom_call.1} parent=5 // pred_check_branch
        %576 = sbr.rel (%p573) target = $region84
      $region83: #{tpu_custom_call.1} parent=5 // pred_region
        %s577 = ssub.s32 %s25, 1
        %p578 = scmp.lt.s32.totalorder %s34, 1
        %s579 = scalar_select %p578, %s34, 1
        %s580 = smul.addr %s579, 8
        %s581 = scalar_lea.vmem %s0, %s580
        %p582 = pneg %p63
        %p583 = pneg %p60
        %p584 = scmp.lt.s32.totalorder %s35, 1
        %s585 = scalar_select %p584, %s35, 1
        %s586 = smul.addr %s585, 4
        %s587 = smul.addr %s586, 4
        %s588 = scalar_lea.vmem %s1, %s587
        %p589 = pneg %p89
        %p590 = pneg %p86
        %p591 = scmp.lt.s32.totalorder %s35, 1
        %s592 = scalar_select %p591, %s35, 1
        %s593 = smul.addr %s592, 4
        %s594 = smul.addr %s593, 4
        %s595 = scalar_lea.vmem %s2, %s594
        %p596 = pneg %p115
        %p597 = pneg %p112
        %p598 = scmp.lt.s32.totalorder %s35, 1
        %s599 = scalar_select %p598, %s35, 1
        %s600 = scalar_lea.vmem %s3, %s599
        %p601 = pneg %p141
        %p602 = pneg %p138
        %p603 = scmp.lt.s32.totalorder %s35, 1
        %s604 = scalar_select %p603, %s35, 1
        %s605 = smul.addr %s604, 4
        %s606 = smul.addr %s605, 4
        %s607 = scalar_lea.vmem %s4, %s606
        %p608 = pneg %p167
        %p609 = pneg %p164
        %p610 = scmp.lt.s32.totalorder %s35, 1
        %s611 = scalar_select %p610, %s35, 1
        %s612 = scalar_lea.vmem %s5, %s611
        %p613 = pneg %p193
        %p614 = pneg %p190
        %p615 = scmp.lt.s32.totalorder %s35, 1
        %s616 = scalar_select %p615, %s35, 1
        %s617 = smul.addr %s616, 16
        %s618 = smul.addr %s617, 4
        %s619 = scalar_lea.vmem %s6, %s618
        %p620 = pneg %p219
        %p621 = pneg %p216
        %p622 = scmp.lt.s32.totalorder %s35, 1
        %s623 = scalar_select %p622, %s35, 1
        %s624 = scalar_lea.vmem %s7, %s623
        %p625 = pneg %p245
        %p626 = pneg %p242
        %p627 = scmp.lt.s32.totalorder %s35, 1
        %s628 = scalar_select %p627, %s35, 1
        %s629 = scalar_lea.vmem %s8, %s628
        %p630 = pneg %p271
        %p631 = pneg %p268
        %p632 = scmp.lt.s32.totalorder %s35, 1
        %s633 = scalar_select %p632, %s35, 1
        %s634 = scalar_lea.vmem %s9, %s633
        %p635 = pneg %p297
        %p636 = pneg %p294
        %p637 = scmp.lt.s32.totalorder %s35, 1
        %s638 = scalar_select %p637, %s35, 1
        %s639 = scalar_lea.vmem %s10, %s638
        %p640 = pneg %p323
        %p641 = pneg %p320
        %p642 = scmp.lt.s32.totalorder %s35, 1
        %s643 = scalar_select %p642, %s35, 1
        %s644 = scalar_lea.vmem %s11, %s643
        %p645 = pneg %p349
        %p646 = pneg %p346
        %p647 = pneg %p370
        %p648 = pneg %p367
        %p649 = pneg %p391
        %p650 = pneg %p388
        %p651 = pneg %p412
        %p652 = pneg %p409
        %p653 = pneg %p433
        %p654 = pneg %p430
        %p655 = pneg %p459
        %p656 = pneg %p456
        %s657 = sand.u32 %s446, 1
        %s658 = scalar_lea.sflag [#allocation4], %s657
        %s659 = sand.u32 %s446, 1
        %s660 = smul.addr %s659, 8
        %s661 = scalar_lea.vmem [#allocation3], %s660
        %p662 = scmp.lt.s32.totalorder %s34, 1
        %s663 = scalar_select %p662, %s34, 1
        %s664 = smul.addr %s663, 8
        %s665 = scalar_lea.vmem %s0, %s664
        %p666 = scmp.lt.s32.totalorder %s35, 1
        %s667 = scalar_select %p666, %s35, 1
        %s668 = smul.addr %s667, 4
        %s669 = smul.addr %s668, 4
        %s670 = scalar_lea.vmem %s1, %s669
        %p671 = scmp.lt.s32.totalorder %s35, 1
        %s672 = scalar_select %p671, %s35, 1
        %s673 = smul.addr %s672, 4
        %s674 = smul.addr %s673, 4
        %s675 = scalar_lea.vmem %s2, %s674
        %p676 = scmp.lt.s32.totalorder %s35, 1
        %s677 = scalar_select %p676, %s35, 1
        %s678 = scalar_lea.vmem %s3, %s677
        %p679 = scmp.lt.s32.totalorder %s35, 1
        %s680 = scalar_select %p679, %s35, 1
        %s681 = smul.addr %s680, 4
        %s682 = smul.addr %s681, 4
        %s683 = scalar_lea.vmem %s4, %s682
        %p684 = scmp.lt.s32.totalorder %s35, 1
        %s685 = scalar_select %p684, %s35, 1
        %s686 = scalar_lea.vmem %s5, %s685
        %p687 = scmp.lt.s32.totalorder %s35, 1
        %s688 = scalar_select %p687, %s35, 1
        %s689 = smul.addr %s688, 16
        %s690 = smul.addr %s689, 4
        %s691 = scalar_lea.vmem %s6, %s690
        %p692 = scmp.lt.s32.totalorder %s35, 1
        %s693 = scalar_select %p692, %s35, 1
        %s694 = scalar_lea.vmem %s7, %s693
        %p695 = scmp.lt.s32.totalorder %s35, 1
        %s696 = scalar_select %p695, %s35, 1
        %s697 = scalar_lea.vmem %s8, %s696
        %p698 = scmp.lt.s32.totalorder %s35, 1
        %s699 = scalar_select %p698, %s35, 1
        %s700 = scalar_lea.vmem %s9, %s699
        %p701 = scmp.lt.s32.totalorder %s35, 1
        %s702 = scalar_select %p701, %s35, 1
        %s703 = scalar_lea.vmem %s10, %s702
        %p704 = scmp.lt.s32.totalorder %s35, 1
        %s705 = scalar_select %p704, %s35, 1
        %s706 = scalar_lea.vmem %s11, %s705
        %p708 = scmp.eq.s32.totalorder %s35, 0
        // Predicated region
        $region85: #{tpu_custom_call.1} parent=83 // pred_check
          %p709 = pneg %p708
        $region86: #{tpu_custom_call.1} parent=83 // pred_check_branch
          %711 = sbr.rel (%p709) target = $region88
        $region87: #{tpu_custom_call.1} parent=83 // pred_region
          %v712 = vld [vmem:[%s665] sm:$0xff]
          %vm713 = vcmask 261120
          %714 = vst.msk [vmem:[#allocation2] sm:$0xff] %vm713, %v712
        $region88: #{tpu_custom_call.1} parent=83 // pred_fallthru
          _
        %v715 = vld [vmem:[#allocation2] sm:$0xff]
        %v716 = vpack.c.bf16 %v715, %v715
        %v717 = vlaneseq
        %v718 = vshrl.u32 %v717, 7
        %v719 = vlaneseq
        %v720 = vand.u32 %v719, 127
        %vm721 = vcmp.ge.s32.totalorder %v718, %v720
        %v722 = vsel %vm721, 0.0, -1e+30
        %v723 = vld [vmem:[%s670] sm:$0xf]
        %v724 = vld [vmem:[%s670 + $0x4] sm:$0xf]
        %v725 = vld [vmem:[%s670 + $0x8] sm:$0xf]
        %v726 = vld [vmem:[%s670 + $0xc] sm:$0xf]
        %v731 = vunpack.c.l.b16 %v723
        %v732 = vunpack.c.l.b16 %v724
        %v733 = vunpack.c.l.b16 %v725
        %v734 = vunpack.c.l.b16 %v726
        %v735 = vpack.c.b16 %v732, %v731
        %v736 = vpack.c.b16 %v734, %v733
        %vm739 = vcmask 261120
        %v741 = vsel %vm739, %v716, 0
        %743 = vmatprep.subr.bf16.mxu0 0
        %744 = vmatpush1.bf16.msra.mxu0 %v735
        %745 = vmatprep.subr.bf16.mxu0 0
        %746 = vmatpush1.bf16.msra.mxu0 %v736
        %747 = vmatprep.subr.bf16.mxu0 0
        %748 = vmatpush1.bf16.msra.mxu0 0
        %749 = vmatprep.subr.bf16.mxu0 0
        %750 = vmatpush1.bf16.msra.mxu0 0
        %751 = vmatprep.subr.bf16.mxu0 0
        %752 = vmatpush1.bf16.msra.mxu0 0
        %753 = vmatprep.subr.bf16.mxu0 0
        %754 = vmatpush1.bf16.msra.mxu0 0
        %755 = vmatprep.subr.bf16.mxu0 0
        %756 = vmatpush1.bf16.msra.mxu0 0
        %757 = vmatprep.subr.bf16.mxu0 0
        %758 = vmatpush1.bf16.msra.mxu0 0
        %759 = vmatprep.subr.bf16.mxu0 0
        %760 = vmatpush1.bf16.msra.mxu0 0
        %761 = vmatprep.subr.bf16.mxu0 0
        %762 = vmatpush1.bf16.msra.mxu0 0
        %763 = vmatprep.subr.bf16.mxu0 0
        %764 = vmatpush1.bf16.msra.mxu0 0
        %765 = vmatprep.subr.bf16.mxu0 0
        %766 = vmatpush1.bf16.msra.mxu0 0
        %767 = vmatprep.subr.bf16.mxu0 0
        %768 = vmatpush1.bf16.msra.mxu0 0
        %769 = vmatprep.subr.bf16.mxu0 0
        %770 = vmatpush1.bf16.msra.mxu0 0
        %771 = vmatprep.subr.bf16.mxu0 0
        %772 = vmatpush1.bf16.msra.mxu0 0
        %773 = vmatprep.subr.bf16.mxu0 0
        %774 = vmatpush1.bf16.msra.mxu0 0
        %775 = vmatprep.mubr.bf16.mxu0 0
        %776 = vmatmul.mubr.bf16.gmra.mrb[0].mxu0 %v741
        %v777 = vpop.f32.mrb[0].mxu0
        %v778 = vadd.f32 0.0, %v777
        %v779 = vpop.f32.mrb[0].mxu0
        %v780 = vpop.f32.mrb[0].mxu0
        %v781 = vpop.f32.mrb[0].mxu0
        %782 = vdwg.mxu0
        %784 = vrot.lane.b32.xlu0 %v778, 120
        %v785 = vpop.permute.xlu0 %784
        %787 = vrot.lane.b32.xlu0 %v778, 112
        %v788 = vpop.permute.xlu0 %787
        %790 = vrot.lane.b32.xlu0 %v778, 104
        %v791 = vpop.permute.xlu0 %790
        %v793 = vpack.c.bf16 %v778, %v778
        %v794 = vpack.c.bf16 %v785, %v785
        %v795 = vpack.c.bf16 %v788, %v788
        %v796 = vpack.c.bf16 %v791, %v791
        %798 = vrot.lane.b32.xlu0 %v793, 96
        %v799 = vpop.permute.xlu0 %798
        %vm800 = vcmask 64512
        %v802 = vsel %vm800, %v793, 0
        %v805 = vsel %vm800, %v799, 0
        %807 = vmatprep.subr.bf16.mxu0 0
        %808 = vmatpush1.bf16.xpose.msra.mxu0 %v805
        %809 = vmatprep.subr.bf16.mxu0 0
        %810 = vmatpush1.bf16.xpose.msra.mxu0 0
        %811 = vmatprep.subr.bf16.mxu0 0
        %812 = vmatpush1.bf16.xpose.msra.mxu0 0
        %813 = vmatprep.subr.bf16.mxu0 0
        %814 = vmatpush1.bf16.xpose.msra.mxu0 0
        %815 = vmatprep.subr.bf16.mxu0 0
        %816 = vmatpush1.bf16.xpose.msra.mxu0 0
        %817 = vmatprep.subr.bf16.mxu0 0
        %818 = vmatpush1.bf16.xpose.msra.mxu0 0
        %819 = vmatprep.subr.bf16.mxu0 0
        %820 = vmatpush1.bf16.xpose.msra.mxu0 0
        %821 = vmatprep.subr.bf16.mxu0 0
        %822 = vmatpush1.bf16.xpose.msra.mxu0 0
        %823 = vmatprep.subr.bf16.mxu0 0
        %824 = vmatpush1.bf16.xpose.msra.mxu0 0
        %825 = vmatprep.subr.bf16.mxu0 0
        %826 = vmatpush1.bf16.xpose.msra.mxu0 0
        %827 = vmatprep.subr.bf16.mxu0 0
        %828 = vmatpush1.bf16.xpose.msra.mxu0 0
        %829 = vmatprep.subr.bf16.mxu0 0
        %830 = vmatpush1.bf16.xpose.msra.mxu0 0
        %831 = vmatprep.subr.bf16.mxu0 0
        %832 = vmatpush1.bf16.xpose.msra.mxu0 0
        %833 = vmatprep.subr.bf16.mxu0 0
        %834 = vmatpush1.bf16.xpose.msra.mxu0 0
        %835 = vmatprep.subr.bf16.mxu0 0
        %836 = vmatpush1.bf16.xpose.msra.mxu0 0
        %837 = vmatprep.subr.bf16.mxu0 0
        %838 = vmatpush1.bf16.xpose.msra.mxu0 0
        %839 = vmatprep.mubr.bf16.mxu0 0
        %840 = vmatmul.mubr.bf16.gmra.mrb[0].mxu0 %v802
        %v841 = vpop.f32.mrb[0].mxu0
        %v842 = vadd.f32 %v722, %v841
        %v843 = vpop.f32.mrb[0].mxu0
        %v844 = vpop.f32.mrb[0].mxu0
        %v845 = vpop.f32.mrb[0].mxu0
        %846 = vdwg.mxu0
        %848 = vrot.lane.b32.xlu0 %v794, 96
        %v849 = vpop.permute.xlu0 %848
        %v851 = vsel %vm800, %v794, 0
        %v854 = vsel %vm800, %v849, 0
        %856 = vmatprep.subr.bf16.mxu0 0
        %857 = vmatpush1.bf16.xpose.msra.mxu0 %v854
        %858 = vmatprep.subr.bf16.mxu0 0
        %859 = vmatpush1.bf16.xpose.msra.mxu0 0
        %860 = vmatprep.subr.bf16.mxu0 0
        %861 = vmatpush1.bf16.xpose.msra.mxu0 0
        %862 = vmatprep.subr.bf16.mxu0 0
        %863 = vmatpush1.bf16.xpose.msra.mxu0 0
        %864 = vmatprep.subr.bf16.mxu0 0
        %865 = vmatpush1.bf16.xpose.msra.mxu0 0
        %866 = vmatprep.subr.bf16.mxu0 0
        %867 = vmatpush1.bf16.xpose.msra.mxu0 0
        %868 = vmatprep.subr.bf16.mxu0 0
        %869 = vmatpush1.bf16.xpose.msra.mxu0 0
        %870 = vmatprep.subr.bf16.mxu0 0
        %871 = vmatpush1.bf16.xpose.msra.mxu0 0
        %872 = vmatprep.subr.bf16.mxu0 0
        %873 = vmatpush1.bf16.xpose.msra.mxu0 0
        %874 = vmatprep.subr.bf16.mxu0 0
        %875 = vmatpush1.bf16.xpose.msra.mxu0 0
        %876 = vmatprep.subr.bf16.mxu0 0
        %877 = vmatpush1.bf16.xpose.msra.mxu0 0
        %878 = vmatprep.subr.bf16.mxu0 0
        %879 = vmatpush1.bf16.xpose.msra.mxu0 0
        %880 = vmatprep.subr.bf16.mxu0 0
        %881 = vmatpush1.bf16.xpose.msra.mxu0 0
        %882 = vmatprep.subr.bf16.mxu0 0
        %883 = vmatpush1.bf16.xpose.msra.mxu0 0
        %884 = vmatprep.subr.bf16.mxu0 0
        %885 = vmatpush1.bf16.xpose.msra.mxu0 0
        %886 = vmatprep.subr.bf16.mxu0 0
        %887 = vmatpush1.bf16.xpose.msra.mxu0 0
        %888 = vmatprep.mubr.bf16.mxu0 0
        %889 = vmatmul.mubr.bf16.gmra.mrb[0].mxu0 %v851
        %v890 = vpop.f32.mrb[0].mxu0
        %v891 = vadd.f32 %v722, %v890
        %v892 = vpop.f32.mrb[0].mxu0
        %v893 = vpop.f32.mrb[0].mxu0
        %v894 = vpop.f32.mrb[0].mxu0
        %895 = vdwg.mxu0
        %897 = vrot.lane.b32.xlu0 %v795, 96
        %v898 = vpop.permute.xlu0 %897
        %v900 = vsel %vm800, %v795, 0
        %v903 = vsel %vm800, %v898, 0
        %905 = vmatprep.subr.bf16.mxu0 0
        %906 = vmatpush1.bf16.xpose.msra.mxu0 %v903
        %907 = vmatprep.subr.bf16.mxu0 0
        %908 = vmatpush1.bf16.xpose.msra.mxu0 0
        %909 = vmatprep.subr.bf16.mxu0 0
        %910 = vmatpush1.bf16.xpose.msra.mxu0 0
        %911 = vmatprep.subr.bf16.mxu0 0
        %912 = vmatpush1.bf16.xpose.msra.mxu0 0
        %913 = vmatprep.subr.bf16.mxu0 0
        %914 = vmatpush1.bf16.xpose.msra.mxu0 0
        %915 = vmatprep.subr.bf16.mxu0 0
        %916 = vmatpush1.bf16.xpose.msra.mxu0 0
        %917 = vmatprep.subr.bf16.mxu0 0
        %918 = vmatpush1.bf16.xpose.msra.mxu0 0
        %919 = vmatprep.subr.bf16.mxu0 0
        %920 = vmatpush1.bf16.xpose.msra.mxu0 0
        %921 = vmatprep.subr.bf16.mxu0 0
        %922 = vmatpush1.bf16.xpose.msra.mxu0 0
        %923 = vmatprep.subr.bf16.mxu0 0
        %924 = vmatpush1.bf16.xpose.msra.mxu0 0
        %925 = vmatprep.subr.bf16.mxu0 0
        %926 = vmatpush1.bf16.xpose.msra.mxu0 0
        %927 = vmatprep.subr.bf16.mxu0 0
        %928 = vmatpush1.bf16.xpose.msra.mxu0 0
        %929 = vmatprep.subr.bf16.mxu0 0
        %930 = vmatpush1.bf16.xpose.msra.mxu0 0
        %931 = vmatprep.subr.bf16.mxu0 0
        %932 = vmatpush1.bf16.xpose.msra.mxu0 0
        %933 = vmatprep.subr.bf16.mxu0 0
        %934 = vmatpush1.bf16.xpose.msra.mxu0 0
        %935 = vmatprep.subr.bf16.mxu0 0
        %936 = vmatpush1.bf16.xpose.msra.mxu0 0
        %937 = vmatprep.mubr.bf16.mxu0 0
        %938 = vmatmul.mubr.bf16.gmra.mrb[0].mxu0 %v900
        %v939 = vpop.f32.mrb[0].mxu0
        %v940 = vadd.f32 %v722, %v939
        %v941 = vpop.f32.mrb[0].mxu0
        %v942 = vpop.f32.mrb[0].mxu0
        %v943 = vpop.f32.mrb[0].mxu0
        %944 = vdwg.mxu0
        %946 = vrot.lane.b32.xlu0 %v796, 96
        %v947 = vpop.permute.xlu0 %946
        %v949 = vsel %vm800, %v796, 0
        %v952 = vsel %vm800, %v947, 0
        %954 = vmatprep.subr.bf16.mxu0 0
        %955 = vmatpush1.bf16.xpose.msra.mxu0 %v952
        %956 = vmatprep.subr.bf16.mxu0 0
        %957 = vmatpush1.bf16.xpose.msra.mxu0 0
        %958 = vmatprep.subr.bf16.mxu0 0
        %959 = vmatpush1.bf16.xpose.msra.mxu0 0
        %960 = vmatprep.subr.bf16.mxu0 0
        %961 = vmatpush1.bf16.xpose.msra.mxu0 0
        %962 = vmatprep.subr.bf16.mxu0 0
        %963 = vmatpush1.bf16.xpose.msra.mxu0 0
        %964 = vmatprep.subr.bf16.mxu0 0
        %965 = vmatpush1.bf16.xpose.msra.mxu0 0
        %966 = vmatprep.subr.bf16.mxu0 0
        %967 = vmatpush1.bf16.xpose.msra.mxu0 0
        %968 = vmatprep.subr.bf16.mxu0 0
        %969 = vmatpush1.bf16.xpose.msra.mxu0 0
        %970 = vmatprep.subr.bf16.mxu0 0
        %971 = vmatpush1.bf16.xpose.msra.mxu0 0
        %972 = vmatprep.subr.bf16.mxu0 0
        %973 = vmatpush1.bf16.xpose.msra.mxu0 0
        %974 = vmatprep.subr.bf16.mxu0 0
        %975 = vmatpush1.bf16.xpose.msra.mxu0 0
        %976 = vmatprep.subr.bf16.mxu0 0
        %977 = vmatpush1.bf16.xpose.msra.mxu0 0
        %978 = vmatprep.subr.bf16.mxu0 0
        %979 = vmatpush1.bf16.xpose.msra.mxu0 0
        %980 = vmatprep.subr.bf16.mxu0 0
        %981 = vmatpush1.bf16.xpose.msra.mxu0 0
        %982 = vmatprep.subr.bf16.mxu0 0
        %983 = vmatpush1.bf16.xpose.msra.mxu0 0
        %984 = vmatprep.subr.bf16.mxu0 0
        %985 = vmatpush1.bf16.xpose.msra.mxu0 0
        %986 = vmatprep.mubr.bf16.mxu0 0
        %987 = vmatmul.mubr.bf16.gmra.mrb[0].mxu0 %v949
        %v988 = vpop.f32.mrb[0].mxu0
        %v989 = vadd.f32 %v722, %v988
        %v990 = vpop.f32.mrb[0].mxu0
        %v991 = vpop.f32.mrb[0].mxu0
        %v992 = vpop.f32.mrb[0].mxu0
        %993 = vdwg.mxu0
        %v994 = vsel %vm800, %v842, -inf
        %995 = vmax.xlane.f32.xlu0 %v994
        %v996 = vpop.xlane.xlu0 %995
        %v997 = vsel %vm800, %v891, -inf
        %998 = vmax.xlane.f32.xlu0 %v997
        %v999 = vpop.xlane.xlu0 %998
        %v1000 = vsel %vm800, %v940, -inf
        %1001 = vmax.xlane.f32.xlu0 %v1000
        %v1002 = vpop.xlane.xlu0 %1001
        %v1003 = vsel %vm800, %v989, -inf
        %1004 = vmax.xlane.f32.xlu0 %v1003
        %v1005 = vpop.xlane.xlu0 %1004
        %v1006 = vsub.f32 %v842, %v996
        %v1007 = vsub.f32 %v891, %v999
        %v1008 = vsub.f32 %v940, %v1002
        %v1009 = vsub.f32 %v989, %v1005
        %v1010 = vmul.f32 %v1006, 1.442695
        %v1011 = vpow.pop %v1010
        %v1012 = vmul.f32 %v1007, 1.442695
        %v1013 = vpow.pop %v1012
        %v1014 = vmul.f32 %v1008, 1.442695
        %v1015 = vpow.pop %v1014
        %v1016 = vmul.f32 %v1009, 1.442695
        %v1017 = vpow.pop %v1016
        %v1018 = vsel %vm800, %v1011, 0.0
        %1019 = vadd.xlane.f32.xlu0 %v1018
        %v1020 = vpop.xlane.xlu0 %1019
        %v1021 = vsel %vm800, %v1013, 0.0
        %1022 = vadd.xlane.f32.xlu0 %v1021
        %v1023 = vpop.xlane.xlu0 %1022
        %v1024 = vsel %vm800, %v1015, 0.0
        %1025 = vadd.xlane.f32.xlu0 %v1024
        %v1026 = vpop.xlane.xlu0 %1025
        %v1027 = vsel %vm800, %v1017, 0.0
        %1028 = vadd.xlane.f32.xlu0 %v1027
        %v1029 = vpop.xlane.xlu0 %1028
        %v1030 = vrcp.pop %v1020
        %v1031 = vrcp.pop %v1023
        %v1032 = vrcp.pop %v1026
        %v1033 = vrcp.pop %v1029
        %v1034 = vmul.f32 %v1011, %v1030
        %v1035 = vmul.f32 %v1013, %v1031
        %v1036 = vmul.f32 %v1015, %v1032
        %v1037 = vmul.f32 %v1017, %v1033
        %v1038 = vpack.c.bf16 %v1034, %v1034
        %v1039 = vpack.c.bf16 %v1035, %v1035
        %v1040 = vpack.c.bf16 %v1036, %v1036
        %v1041 = vpack.c.bf16 %v1037, %v1037
        %1042 = vrot.lane.b32.xlu0 %v793, 64
        %v1043 = vpop.permute.xlu0 %1042
        %v1045 = vsel %vm800, %v1038, 0
        %vm1047 = vcmask 1043456
        %v1049 = vsel %vm1047, %v1043, 0
        %1051 = vmatprep.subr.bf16.mxu0 0
        %1052 = vmatpush1.bf16.msra.mxu0 %v1049
        %1053 = vmatprep.subr.bf16.mxu0 0
        %1054 = vmatpush1.bf16.msra.mxu0 0
        %1055 = vmatprep.subr.bf16.mxu0 0
        %1056 = vmatpush1.bf16.msra.mxu0 0
        %1057 = vmatprep.subr.bf16.mxu0 0
        %1058 = vmatpush1.bf16.msra.mxu0 0
        %1059 = vmatprep.subr.bf16.mxu0 0
        %1060 = vmatpush1.bf16.msra.mxu0 0
        %1061 = vmatprep.subr.bf16.mxu0 0
        %1062 = vmatpush1.bf16.msra.mxu0 0
        %1063 = vmatprep.subr.bf16.mxu0 0
        %1064 = vmatpush1.bf16.msra.mxu0 0
        %1065 = vmatprep.subr.bf16.mxu0 0
        %1066 = vmatpush1.bf16.msra.mxu0 0
        %1067 = vmatprep.subr.bf16.mxu0 0
        %1068 = vmatpush1.bf16.msra.mxu0 0
        %1069 = vmatprep.subr.bf16.mxu0 0
        %1070 = vmatpush1.bf16.msra.mxu0 0
        %1071 = vmatprep.subr.bf16.mxu0 0
        %1072 = vmatpush1.bf16.msra.mxu0 0
        %1073 = vmatprep.subr.bf16.mxu0 0
        %1074 = vmatpush1.bf16.msra.mxu0 0
        %1075 = vmatprep.subr.bf16.mxu0 0
        %1076 = vmatpush1.bf16.msra.mxu0 0
        %1077 = vmatprep.subr.bf16.mxu0 0
        %1078 = vmatpush1.bf16.msra.mxu0 0
        %1079 = vmatprep.subr.bf16.mxu0 0
        %1080 = vmatpush1.bf16.msra.mxu0 0
        %1081 = vmatprep.subr.bf16.mxu0 0
        %1082 = vmatpush1.bf16.msra.mxu0 0
        %1083 = vmatprep.mubr.bf16.mxu0 0
        %1084 = vmatmul.mubr.bf16.gmra.mrb[0].mxu0 %v1045
        %v1085 = vpop.f32.mrb[0].mxu0
        %v1086 = vadd.f32 0.0, %v1085
        %v1087 = vpop.f32.mrb[0].mxu0
        %v1088 = vpop.f32.mrb[0].mxu0
        %v1089 = vpop.f32.mrb[0].mxu0
        %1090 = vdwg.mxu0
        %1091 = vrot.lane.b32.xlu0 %v794, 64
        %v1092 = vpop.permute.xlu0 %1091
        %v1094 = vsel %vm800, %v1039, 0
        %v1097 = vsel %vm1047, %v1092, 0
        %1099 = vmatprep.subr.bf16.mxu0 0
        %1100 = vmatpush1.bf16.msra.mxu0 %v1097
        %1101 = vmatprep.subr.bf16.mxu0 0
        %1102 = vmatpush1.bf16.msra.mxu0 0
        %1103 = vmatprep.subr.bf16.mxu0 0
        %1104 = vmatpush1.bf16.msra.mxu0 0
        %1105 = vmatprep.subr.bf16.mxu0 0
        %1106 = vmatpush1.bf16.msra.mxu0 0
        %1107 = vmatprep.subr.bf16.mxu0 0
        %1108 = vmatpush1.bf16.msra.mxu0 0
        %1109 = vmatprep.subr.bf16.mxu0 0
        %1110 = vmatpush1.bf16.msra.mxu0 0
        %1111 = vmatprep.subr.bf16.mxu0 0
        %1112 = vmatpush1.bf16.msra.mxu0 0
        %1113 = vmatprep.subr.bf16.mxu0 0
        %1114 = vmatpush1.bf16.msra.mxu0 0
        %1115 = vmatprep.subr.bf16.mxu0 0
        %1116 = vmatpush1.bf16.msra.mxu0 0
        %1117 = vmatprep.subr.bf16.mxu0 0
        %1118 = vmatpush1.bf16.msra.mxu0 0
        %1119 = vmatprep.subr.bf16.mxu0 0
        %1120 = vmatpush1.bf16.msra.mxu0 0
        %1121 = vmatprep.subr.bf16.mxu0 0
        %1122 = vmatpush1.bf16.msra.mxu0 0
        %1123 = vmatprep.subr.bf16.mxu0 0
        %1124 = vmatpush1.bf16.msra.mxu0 0
        %1125 = vmatprep.subr.bf16.mxu0 0
        %1126 = vmatpush1.bf16.msra.mxu0 0
        %1127 = vmatprep.subr.bf16.mxu0 0
        %1128 = vmatpush1.bf16.msra.mxu0 0
        %1129 = vmatprep.subr.bf16.mxu0 0
        %1130 = vmatpush1.bf16.msra.mxu0 0
        %1131 = vmatprep.mubr.bf16.mxu0 0
        %1132 = vmatmul.mubr.bf16.gmra.mrb[0].mxu0 %v1094
        %v1133 = vpop.f32.mrb[0].mxu0
        %v1134 = vadd.f32 0.0, %v1133
        %v1135 = vpop.f32.mrb[0].mxu0
        %v1136 = vpop.f32.mrb[0].mxu0
        %v1137 = vpop.f32.mrb[0].mxu0
        %1138 = vdwg.mxu0
        %1139 = vrot.lane.b32.xlu0 %v795, 64
        %v1140 = vpop.permute.xlu0 %1139
        %v1142 = vsel %vm800, %v1040, 0
        %v1145 = vsel %vm1047, %v1140, 0
        %1147 = vmatprep.subr.bf16.mxu0 0
        %1148 = vmatpush1.bf16.msra.mxu0 %v1145
        %1149 = vmatprep.subr.bf16.mxu0 0
        %1150 = vmatpush1.bf16.msra.mxu0 0
        %1151 = vmatprep.subr.bf16.mxu0 0
        %1152 = vmatpush1.bf16.msra.mxu0 0
        %1153 = vmatprep.subr.bf16.mxu0 0
        %1154 = vmatpush1.bf16.msra.mxu0 0
        %1155 = vmatprep.subr.bf16.mxu0 0
        %1156 = vmatpush1.bf16.msra.mxu0 0
        %1157 = vmatprep.subr.bf16.mxu0 0
        %1158 = vmatpush1.bf16.msra.mxu0 0
        %1159 = vmatprep.subr.bf16.mxu0 0
        %1160 = vmatpush1.bf16.msra.mxu0 0
        %1161 = vmatprep.subr.bf16.mxu0 0
        %1162 = vmatpush1.bf16.msra.mxu0 0
        %1163 = vmatprep.subr.bf16.mxu0 0
        %1164 = vmatpush1.bf16.msra.mxu0 0
        %1165 = vmatprep.subr.bf16.mxu0 0
        %1166 = vmatpush1.bf16.msra.mxu0 0
        %1167 = vmatprep.subr.bf16.mxu0 0
        %1168 = vmatpush1.bf16.msra.mxu0 0
        %1169 = vmatprep.subr.bf16.mxu0 0
        %1170 = vmatpush1.bf16.msra.mxu0 0
        %1171 = vmatprep.subr.bf16.mxu0 0
        %1172 = vmatpush1.bf16.msra.mxu0 0
        %1173 = vmatprep.subr.bf16.mxu0 0
        %1174 = vmatpush1.bf16.msra.mxu0 0
        %1175 = vmatprep.subr.bf16.mxu0 0
        %1176 = vmatpush1.bf16.msra.mxu0 0
        %1177 = vmatprep.subr.bf16.mxu0 0
        %1178 = vmatpush1.bf16.msra.mxu0 0
        %1179 = vmatprep.mubr.bf16.mxu0 0
        %1180 = vmatmul.mubr.bf16.gmra.mrb[0].mxu0 %v1142
        %v1181 = vpop.f32.mrb[0].mxu0
        %v1182 = vadd.f32 0.0, %v1181
        %v1183 = vpop.f32.mrb[0].mxu0
        %v1184 = vpop.f32.mrb[0].mxu0
        %v1185 = vpop.f32.mrb[0].mxu0
        %1186 = vdwg.mxu0
        %1187 = vrot.lane.b32.xlu0 %v796, 64
        %v1188 = vpop.permute.xlu0 %1187
        %v1190 = vsel %vm800, %v1041, 0
        %v1193 = vsel %vm1047, %v1188, 0
        %1195 = vmatprep.subr.bf16.mxu0 0
        %1196 = vmatpush1.bf16.msra.mxu0 %v1193
        %1197 = vmatprep.subr.bf16.mxu0 0
        %1198 = vmatpush1.bf16.msra.mxu0 0
        %1199 = vmatprep.subr.bf16.mxu0 0
        %1200 = vmatpush1.bf16.msra.mxu0 0
        %1201 = vmatprep.subr.bf16.mxu0 0
        %1202 = vmatpush1.bf16.msra.mxu0 0
        %1203 = vmatprep.subr.bf16.mxu0 0
        %1204 = vmatpush1.bf16.msra.mxu0 0
        %1205 = vmatprep.subr.bf16.mxu0 0
        %1206 = vmatpush1.bf16.msra.mxu0 0
        %1207 = vmatprep.subr.bf16.mxu0 0
        %1208 = vmatpush1.bf16.msra.mxu0 0
        %1209 = vmatprep.subr.bf16.mxu0 0
        %1210 = vmatpush1.bf16.msra.mxu0 0
        %1211 = vmatprep.subr.bf16.mxu0 0
        %1212 = vmatpush1.bf16.msra.mxu0 0
        %1213 = vmatprep.subr.bf16.mxu0 0
        %1214 = vmatpush1.bf16.msra.mxu0 0
        %1215 = vmatprep.subr.bf16.mxu0 0
        %1216 = vmatpush1.bf16.msra.mxu0 0
        %1217 = vmatprep.subr.bf16.mxu0 0
        %1218 = vmatpush1.bf16.msra.mxu0 0
        %1219 = vmatprep.subr.bf16.mxu0 0
        %1220 = vmatpush1.bf16.msra.mxu0 0
        %1221 = vmatprep.subr.bf16.mxu0 0
        %1222 = vmatpush1.bf16.msra.mxu0 0
        %1223 = vmatprep.subr.bf16.mxu0 0
        %1224 = vmatpush1.bf16.msra.mxu0 0
        %1225 = vmatprep.subr.bf16.mxu0 0
        %1226 = vmatpush1.bf16.msra.mxu0 0
        %1227 = vmatprep.mubr.bf16.mxu0 0
        %1228 = vmatmul.mubr.bf16.gmra.mrb[0].mxu0 %v1190
        %v1229 = vpop.f32.mrb[0].mxu0
        %v1230 = vadd.f32 0.0, %v1229
        %v1231 = vpop.f32.mrb[0].mxu0
        %v1232 = vpop.f32.mrb[0].mxu0
        %v1233 = vpop.f32.mrb[0].mxu0
        %1234 = vdwg.mxu0
        %v1235 = vpack.c.bf16 %v1086, %v1086
        %v1236 = vpack.c.bf16 %v1134, %v1134
        %v1237 = vpack.c.bf16 %v1182, %v1182
        %v1238 = vpack.c.bf16 %v1230, %v1230
        %v1239 = vld [vmem:[%s675] sm:$0xf]
        %v1240 = vld [vmem:[%s675 + $0x4] sm:$0xf]
        %v1241 = vld [vmem:[%s675 + $0x8] sm:$0xf]
        %v1242 = vld [vmem:[%s675 + $0xc] sm:$0xf]
        %v1244 = vsel %vm800, %v1235, 0
        %v1247 = vsel %vm1047, %v1239, 0
        %1249 = vmatprep.subr.bf16.mxu0 0
        %1250 = vmatpush1.bf16.msra.mxu0 %v1247
        %1251 = vmatprep.subr.bf16.mxu0 0
        %1252 = vmatpush1.bf16.msra.mxu0 0
        %1253 = vmatprep.subr.bf16.mxu0 0
        %1254 = vmatpush1.bf16.msra.mxu0 0
        %1255 = vmatprep.subr.bf16.mxu0 0
        %1256 = vmatpush1.bf16.msra.mxu0 0
        %1257 = vmatprep.subr.bf16.mxu0 0
        %1258 = vmatpush1.bf16.msra.mxu0 0
        %1259 = vmatprep.subr.bf16.mxu0 0
        %1260 = vmatpush1.bf16.msra.mxu0 0
        %1261 = vmatprep.subr.bf16.mxu0 0
        %1262 = vmatpush1.bf16.msra.mxu0 0
        %1263 = vmatprep.subr.bf16.mxu0 0
        %1264 = vmatpush1.bf16.msra.mxu0 0
        %1265 = vmatprep.subr.bf16.mxu0 0
        %1266 = vmatpush1.bf16.msra.mxu0 0
        %1267 = vmatprep.subr.bf16.mxu0 0
        %1268 = vmatpush1.bf16.msra.mxu0 0
        %1269 = vmatprep.subr.bf16.mxu0 0
        %1270 = vmatpush1.bf16.msra.mxu0 0
        %1271 = vmatprep.subr.bf16.mxu0 0
        %1272 = vmatpush1.bf16.msra.mxu0 0
        %1273 = vmatprep.subr.bf16.mxu0 0
        %1274 = vmatpush1.bf16.msra.mxu0 0
        %1275 = vmatprep.subr.bf16.mxu0 0
        %1276 = vmatpush1.bf16.msra.mxu0 0
        %1277 = vmatprep.subr.bf16.mxu0 0
        %1278 = vmatpush1.bf16.msra.mxu0 0
        %1279 = vmatprep.subr.bf16.mxu0 0
        %1280 = vmatpush1.bf16.msra.mxu0 0
        %1281 = vmatprep.mubr.bf16.mxu0 0
        %1282 = vmatmul.mubr.bf16.gmra.mrb[0].mxu0 %v1244
        %v1283 = vpop.f32.mrb[0].mxu0
        %v1284 = vadd.f32 0.0, %v1283
        %v1285 = vpop.f32.mrb[0].mxu0
        %v1286 = vpop.f32.mrb[0].mxu0
        %v1287 = vpop.f32.mrb[0].mxu0
        %1288 = vdwg.mxu0
        %v1290 = vsel %vm800, %v1236, 0
        %v1293 = vsel %vm1047, %v1240, 0
        %1295 = vmatprep.subr.bf16.mxu0 0
        %1296 = vmatpush1.bf16.msra.mxu0 %v1293
        %1297 = vmatprep.subr.bf16.mxu0 0
        %1298 = vmatpush1.bf16.msra.mxu0 0
        %1299 = vmatprep.subr.bf16.mxu0 0
        %1300 = vmatpush1.bf16.msra.mxu0 0
        %1301 = vmatprep.subr.bf16.mxu0 0
        %1302 = vmatpush1.bf16.msra.mxu0 0
        %1303 = vmatprep.subr.bf16.mxu0 0
        %1304 = vmatpush1.bf16.msra.mxu0 0
        %1305 = vmatprep.subr.bf16.mxu0 0
        %1306 = vmatpush1.bf16.msra.mxu0 0
        %1307 = vmatprep.subr.bf16.mxu0 0
        %1308 = vmatpush1.bf16.msra.mxu0 0
        %1309 = vmatprep.subr.bf16.mxu0 0
        %1310 = vmatpush1.bf16.msra.mxu0 0
        %1311 = vmatprep.subr.bf16.mxu0 0
        %1312 = vmatpush1.bf16.msra.mxu0 0
        %1313 = vmatprep.subr.bf16.mxu0 0
        %1314 = vmatpush1.bf16.msra.mxu0 0
        %1315 = vmatprep.subr.bf16.mxu0 0
        %1316 = vmatpush1.bf16.msra.mxu0 0
        %1317 = vmatprep.subr.bf16.mxu0 0
        %1318 = vmatpush1.bf16.msra.mxu0 0
        %1319 = vmatprep.subr.bf16.mxu0 0
        %1320 = vmatpush1.bf16.msra.mxu0 0
        %1321 = vmatprep.subr.bf16.mxu0 0
        %1322 = vmatpush1.bf16.msra.mxu0 0
        %1323 = vmatprep.subr.bf16.mxu0 0
        %1324 = vmatpush1.bf16.msra.mxu0 0
        %1325 = vmatprep.subr.bf16.mxu0 0
        %1326 = vmatpush1.bf16.msra.mxu0 0
        %1327 = vmatprep.mubr.bf16.mxu0 0
        %1328 = vmatmul.mubr.bf16.gmra.mrb[0].mxu0 %v1290
        %v1329 = vpop.f32.mrb[0].mxu0
        %v1330 = vadd.f32 0.0, %v1329
        %v1331 = vpop.f32.mrb[0].mxu0
        %v1332 = vpop.f32.mrb[0].mxu0
        %v1333 = vpop.f32.mrb[0].mxu0
        %1334 = vdwg.mxu0
        %v1336 = vsel %vm800, %v1237, 0
        %v1339 = vsel %vm1047, %v1241, 0
        %1341 = vmatprep.subr.bf16.mxu0 0
        %1342 = vmatpush1.bf16.msra.mxu0 %v1339
        %1343 = vmatprep.subr.bf16.mxu0 0
        %1344 = vmatpush1.bf16.msra.mxu0 0
        %1345 = vmatprep.subr.bf16.mxu0 0
        %1346 = vmatpush1.bf16.msra.mxu0 0
        %1347 = vmatprep.subr.bf16.mxu0 0
        %1348 = vmatpush1.bf16.msra.mxu0 0
        %1349 = vmatprep.subr.bf16.mxu0 0
        %1350 = vmatpush1.bf16.msra.mxu0 0
        %1351 = vmatprep.subr.bf16.mxu0 0
        %1352 = vmatpush1.bf16.msra.mxu0 0
        %1353 = vmatprep.subr.bf16.mxu0 0
        %1354 = vmatpush1.bf16.msra.mxu0 0
        %1355 = vmatprep.subr.bf16.mxu0 0
        %1356 = vmatpush1.bf16.msra.mxu0 0
        %1357 = vmatprep.subr.bf16.mxu0 0
        %1358 = vmatpush1.bf16.msra.mxu0 0
        %1359 = vmatprep.subr.bf16.mxu0 0
        %1360 = vmatpush1.bf16.msra.mxu0 0
        %1361 = vmatprep.subr.bf16.mxu0 0
        %1362 = vmatpush1.bf16.msra.mxu0 0
        %1363 = vmatprep.subr.bf16.mxu0 0
        %1364 = vmatpush1.bf16.msra.mxu0 0
        %1365 = vmatprep.subr.bf16.mxu0 0
        %1366 = vmatpush1.bf16.msra.mxu0 0
        %1367 = vmatprep.subr.bf16.mxu0 0
        %1368 = vmatpush1.bf16.msra.mxu0 0
        %1369 = vmatprep.subr.bf16.mxu0 0
        %1370 = vmatpush1.bf16.msra.mxu0 0
        %1371 = vmatprep.subr.bf16.mxu0 0
        %1372 = vmatpush1.bf16.msra.mxu0 0
        %1373 = vmatprep.mubr.bf16.mxu0 0
        %1374 = vmatmul.mubr.bf16.gmra.mrb[0].mxu0 %v1336
        %v1375 = vpop.f32.mrb[0].mxu0
        %v1376 = vadd.f32 0.0, %v1375
        %v1377 = vpop.f32.mrb[0].mxu0
        %v1378 = vpop.f32.mrb[0].mxu0
        %v1379 = vpop.f32.mrb[0].mxu0
        %1380 = vdwg.mxu0
        %v1382 = vsel %vm800, %v1238, 0
        %v1385 = vsel %vm1047, %v1242, 0
        %1387 = vmatprep.subr.bf16.mxu0 0
        %1388 = vmatpush1.bf16.msra.mxu0 %v1385
        %1389 = vmatprep.subr.bf16.mxu0 0
        %1390 = vmatpush1.bf16.msra.mxu0 0
        %1391 = vmatprep.subr.bf16.mxu0 0
        %1392 = vmatpush1.bf16.msra.mxu0 0
        %1393 = vmatprep.subr.bf16.mxu0 0
        %1394 = vmatpush1.bf16.msra.mxu0 0
        %1395 = vmatprep.subr.bf16.mxu0 0
        %1396 = vmatpush1.bf16.msra.mxu0 0
        %1397 = vmatprep.subr.bf16.mxu0 0
        %1398 = vmatpush1.bf16.msra.mxu0 0
        %1399 = vmatprep.subr.bf16.mxu0 0
        %1400 = vmatpush1.bf16.msra.mxu0 0
        %1401 = vmatprep.subr.bf16.mxu0 0
        %1402 = vmatpush1.bf16.msra.mxu0 0
        %1403 = vmatprep.subr.bf16.mxu0 0
        %1404 = vmatpush1.bf16.msra.mxu0 0
        %1405 = vmatprep.subr.bf16.mxu0 0
        %1406 = vmatpush1.bf16.msra.mxu0 0
        %1407 = vmatprep.subr.bf16.mxu0 0
        %1408 = vmatpush1.bf16.msra.mxu0 0
        %1409 = vmatprep.subr.bf16.mxu0 0
        %1410 = vmatpush1.bf16.msra.mxu0 0
        %1411 = vmatprep.subr.bf16.mxu0 0
        %1412 = vmatpush1.bf16.msra.mxu0 0
        %1413 = vmatprep.subr.bf16.mxu0 0
        %1414 = vmatpush1.bf16.msra.mxu0 0
        %1415 = vmatprep.subr.bf16.mxu0 0
        %1416 = vmatpush1.bf16.msra.mxu0 0
        %1417 = vmatprep.subr.bf16.mxu0 0
        %1418 = vmatpush1.bf16.msra.mxu0 0
        %1419 = vmatprep.mubr.bf16.mxu0 0
        %1420 = vmatmul.mubr.bf16.gmra.mrb[0].mxu0 %v1382
        %v1421 = vpop.f32.mrb[0].mxu0
        %v1422 = vadd.f32 0.0, %v1421
        %v1423 = vpop.f32.mrb[0].mxu0
        %v1424 = vpop.f32.mrb[0].mxu0
        %v1425 = vpop.f32.mrb[0].mxu0
        %1426 = vdwg.mxu0
        %v1427 = vsel %vm739, %v1284, 0.0
        %v1428 = vsel %vm739, %v1330, 0.0
        %v1429 = vadd.f32 %v1427, %v1428
        %v1430 = vsel %vm739, %v1376, 0.0
        %v1431 = vadd.f32 %v1429, %v1430
        %v1432 = vsel %vm739, %v1422, 0.0
        %v1433 = vadd.f32 %v1431, %v1432
        %v1434 = vld [vmem:[%s678] sm:$0x1]
        %v1436 = vlaneseq
        %v1437 = vshrl.u32 %v1436, 7
        %v1438 = vsub.s32 0, %v1437
        %v1439 = vrot.slane %v1434, %v1438
        %v1441 = vadd.f32 %v1433, %v1439
        %v1442 = vadd.f32 %v1441, %v715
        %v1443 = vld [vmem:[%s697] sm:$0x1]
        %v1444 = vld [vmem:[%s700] sm:$0x1]
        %v1445 = vsel %vm739, %v1442, 0.0
        %1446 = vadd.xlane.f32.xlu0 %v1445
        %v1447 = vpop.xlane.xlu0 %1446
        %v1448 = vrcp.pop 32.0
        %v1449 = vmul.f32 %v1447, %v1448
        %v1450 = vsub.f32 %v1442, %v1449
        %v1451 = vmul.f32 %v1450, %v1450
        %v1452 = vsel %vm739, %v1451, 0.0
        %1453 = vadd.xlane.f32.xlu0 %v1452
        %v1454 = vpop.xlane.xlu0 %1453
        %v1455 = vmul.f32 %v1454, %v1448
        %v1456 = vadd.f32 %v1455, 1e-05
        %v1457 = vrsqrt.pop %v1456
        %v1458 = vmul.f32 %v1450, %v1457
        %v1460 = vlaneseq
        %v1461 = vshrl.u32 %v1460, 7
        %v1462 = vsub.s32 0, %v1461
        %v1463 = vrot.slane %v1443, %v1462
        %v1465 = vmul.f32 %v1458, %v1463
        %v1467 = vlaneseq
        %v1468 = vshrl.u32 %v1467, 7
        %v1469 = vsub.s32 0, %v1468
        %v1470 = vrot.slane %v1444, %v1469
        %v1472 = vadd.f32 %v1465, %v1470
        %v1473 = vpack.c.bf16 %v1472, %v1472
        %v1474 = vld [vmem:[%s683] sm:$0xf]
        %v1475 = vld [vmem:[%s683 + $0x4] sm:$0xf]
        %v1476 = vld [vmem:[%s683 + $0x8] sm:$0xf]
        %v1477 = vld [vmem:[%s683 + $0xc] sm:$0xf]
        %v1478 = vld [vmem:[%s686] sm:$0x1]
        %v1480 = vlaneseq
        %v1481 = vshrl.u32 %v1480, 7
        %v1482 = vsub.s32 0, %v1481
        %v1483 = vrot.slane %v1478, %v1482
        %v1489 = vunpack.c.l.b16 %v1474
        %v1490 = vunpack.c.l.b16 %v1475
        %v1491 = vunpack.c.l.b16 %v1476
        %v1492 = vunpack.c.l.b16 %v1477
        %v1493 = vpack.c.b16 %v1490, %v1489
        %v1494 = vpack.c.b16 %v1492, %v1491
        %v1498 = vsel %vm739, %v1473, 0
        %1500 = vmatprep.subr.bf16.mxu0 0
        %1501 = vmatpush1.bf16.msra.mxu0 %v1493
        %1502 = vmatprep.subr.bf16.mxu0 0
        %1503 = vmatpush1.bf16.msra.mxu0 %v1494
        %1504 = vmatprep.subr.bf16.mxu0 0
        %1505 = vmatpush1.bf16.msra.mxu0 0
        %1506 = vmatprep.subr.bf16.mxu0 0
        %1507 = vmatpush1.bf16.msra.mxu0 0
        %1508 = vmatprep.subr.bf16.mxu0 0
        %1509 = vmatpush1.bf16.msra.mxu0 0
        %1510 = vmatprep.subr.bf16.mxu0 0
        %1511 = vmatpush1.bf16.msra.mxu0 0
        %1512 = vmatprep.subr.bf16.mxu0 0
        %1513 = vmatpush1.bf16.msra.mxu0 0
        %1514 = vmatprep.subr.bf16.mxu0 0
        %1515 = vmatpush1.bf16.msra.mxu0 0
        %1516 = vmatprep.subr.bf16.mxu0 0
        %1517 = vmatpush1.bf16.msra.mxu0 0
        %1518 = vmatprep.subr.bf16.mxu0 0
        %1519 = vmatpush1.bf16.msra.mxu0 0
        %1520 = vmatprep.subr.bf16.mxu0 0
        %1521 = vmatpush1.bf16.msra.mxu0 0
        %1522 = vmatprep.subr.bf16.mxu0 0
        %1523 = vmatpush1.bf16.msra.mxu0 0
        %1524 = vmatprep.subr.bf16.mxu0 0
        %1525 = vmatpush1.bf16.msra.mxu0 0
        %1526 = vmatprep.subr.bf16.mxu0 0
        %1527 = vmatpush1.bf16.msra.mxu0 0
        %1528 = vmatprep.subr.bf16.mxu0 0
        %1529 = vmatpush1.bf16.msra.mxu0 0
        %1530 = vmatprep.subr.bf16.mxu0 0
        %1531 = vmatpush1.bf16.msra.mxu0 0
        %1532 = vmatprep.mubr.bf16.mxu0 0
        %1533 = vmatmul.mubr.bf16.gmra.mrb[0].mxu0 %v1498
        %v1534 = vpop.f32.mrb[0].mxu0
        %v1535 = vadd.f32 %v1483, %v1534
        %v1536 = vpop.f32.mrb[0].mxu0
        %v1537 = vpop.f32.mrb[0].mxu0
        %v1538 = vpop.f32.mrb[0].mxu0
        %1539 = vdwg.mxu0
        %v1540 = vmax.f32 %v1535, 0.0
        %v1541 = vpack.c.bf16 %v1540, %v1540
        %v1542 = vld [vmem:[%s691] sm:$0xf]
        %v1543 = vld [vmem:[%s691 + $0x4] sm:$0xf]
        %v1544 = vld [vmem:[%s691 + $0x8] sm:$0xf]
        %v1545 = vld [vmem:[%s691 + $0xc] sm:$0xf]
        %v1546 = vld [vmem:[%s691 + $0x10] sm:$0xf]
        %v1547 = vld [vmem:[%s691 + $0x14] sm:$0xf]
        %v1548 = vld [vmem:[%s691 + $0x18] sm:$0xf]
        %v1549 = vld [vmem:[%s691 + $0x1c] sm:$0xf]
        %v1550 = vld [vmem:[%s691 + $0x20] sm:$0xf]
        %v1551 = vld [vmem:[%s691 + $0x24] sm:$0xf]
        %v1552 = vld [vmem:[%s691 + $0x28] sm:$0xf]
        %v1553 = vld [vmem:[%s691 + $0x2c] sm:$0xf]
        %v1554 = vld [vmem:[%s691 + $0x30] sm:$0xf]
        %v1555 = vld [vmem:[%s691 + $0x34] sm:$0xf]
        %v1556 = vld [vmem:[%s691 + $0x38] sm:$0xf]
        %v1557 = vld [vmem:[%s691 + $0x3c] sm:$0xf]
        %v1558 = vld [vmem:[%s694] sm:$0x1]
        %v1560 = vlaneseq
        %v1561 = vshrl.u32 %v1560, 7
        %v1562 = vsub.s32 0, %v1561
        %v1563 = vrot.slane %v1558, %v1562
        %v1581 = vunpack.c.l.b16 %v1542
        %v1582 = vunpack.c.l.b16 %v1543
        %v1583 = vunpack.c.l.b16 %v1544
        %v1584 = vunpack.c.l.b16 %v1545
        %v1585 = vunpack.c.l.b16 %v1546
        %v1586 = vunpack.c.l.b16 %v1547
        %v1587 = vunpack.c.l.b16 %v1548
        %v1588 = vunpack.c.l.b16 %v1549
        %v1589 = vunpack.c.l.b16 %v1550
        %v1590 = vunpack.c.l.b16 %v1551
        %v1591 = vunpack.c.l.b16 %v1552
        %v1592 = vunpack.c.l.b16 %v1553
        %v1593 = vunpack.c.l.b16 %v1554
        %v1594 = vunpack.c.l.b16 %v1555
        %v1595 = vunpack.c.l.b16 %v1556
        %v1596 = vunpack.c.l.b16 %v1557
        %v1597 = vpack.c.b16 %v1582, %v1581
        %v1598 = vpack.c.b16 %v1584, %v1583
        %v1599 = vpack.c.b16 %v1586, %v1585
        %v1600 = vpack.c.b16 %v1588, %v1587
        %v1601 = vpack.c.b16 %v1590, %v1589
        %v1602 = vpack.c.b16 %v1592, %v1591
        %v1603 = vpack.c.b16 %v1594, %v1593
        %v1604 = vpack.c.b16 %v1596, %v1595
        %1613 = vmatprep.subr.bf16.mxu0 0
        %1614 = vmatpush1.bf16.msra.mxu0 %v1597
        %1615 = vmatprep.subr.bf16.mxu0 0
        %1616 = vmatpush1.bf16.msra.mxu0 %v1598
        %1617 = vmatprep.subr.bf16.mxu0 0
        %1618 = vmatpush1.bf16.msra.mxu0 %v1599
        %1619 = vmatprep.subr.bf16.mxu0 0
        %1620 = vmatpush1.bf16.msra.mxu0 %v1600
        %1621 = vmatprep.subr.bf16.mxu0 0
        %1622 = vmatpush1.bf16.msra.mxu0 %v1601
        %1623 = vmatprep.subr.bf16.mxu0 0
        %1624 = vmatpush1.bf16.msra.mxu0 %v1602
        %1625 = vmatprep.subr.bf16.mxu0 0
        %1626 = vmatpush1.bf16.msra.mxu0 %v1603
        %1627 = vmatprep.subr.bf16.mxu0 0
        %1628 = vmatpush1.bf16.msra.mxu0 %v1604
        %1629 = vmatprep.subr.bf16.mxu0 0
        %1630 = vmatpush1.bf16.msra.mxu0 0
        %1631 = vmatprep.subr.bf16.mxu0 0
        %1632 = vmatpush1.bf16.msra.mxu0 0
        %1633 = vmatprep.subr.bf16.mxu0 0
        %1634 = vmatpush1.bf16.msra.mxu0 0
        %1635 = vmatprep.subr.bf16.mxu0 0
        %1636 = vmatpush1.bf16.msra.mxu0 0
        %1637 = vmatprep.subr.bf16.mxu0 0
        %1638 = vmatpush1.bf16.msra.mxu0 0
        %1639 = vmatprep.subr.bf16.mxu0 0
        %1640 = vmatpush1.bf16.msra.mxu0 0
        %1641 = vmatprep.subr.bf16.mxu0 0
        %1642 = vmatpush1.bf16.msra.mxu0 0
        %1643 = vmatprep.subr.bf16.mxu0 0
        %1644 = vmatpush1.bf16.msra.mxu0 0
        %1645 = vmatprep.mubr.bf16.mxu0 0
        %1646 = vmatmul.mubr.bf16.gmra.mrb[0].mxu0 %v1541
        %v1647 = vpop.f32.mrb[0].mxu0
        %v1648 = vadd.f32 %v1563, %v1647
        %v1649 = vpop.f32.mrb[0].mxu0
        %v1650 = vpop.f32.mrb[0].mxu0
        %v1651 = vpop.f32.mrb[0].mxu0
        %1652 = vdwg.mxu0
        %v1653 = vadd.f32 %v1648, %v1472
        %v1654 = vld [vmem:[%s703] sm:$0x1]
        %v1655 = vld [vmem:[%s706] sm:$0x1]
        %v1656 = vsel %vm739, %v1653, 0.0
        %1657 = vadd.xlane.f32.xlu0 %v1656
        %v1658 = vpop.xlane.xlu0 %1657
        %v1659 = vmul.f32 %v1658, %v1448
        %v1660 = vsub.f32 %v1653, %v1659
        %v1661 = vmul.f32 %v1660, %v1660
        %v1662 = vsel %vm739, %v1661, 0.0
        %1663 = vadd.xlane.f32.xlu0 %v1662
        %v1664 = vpop.xlane.xlu0 %1663
        %v1665 = vmul.f32 %v1664, %v1448
        %v1666 = vadd.f32 %v1665, 1e-05
        %v1667 = vrsqrt.pop %v1666
        %v1668 = vmul.f32 %v1660, %v1667
        %v1670 = vlaneseq
        %v1671 = vshrl.u32 %v1670, 7
        %v1672 = vsub.s32 0, %v1671
        %v1673 = vrot.slane %v1654, %v1672
        %v1675 = vmul.f32 %v1668, %v1673
        %v1677 = vlaneseq
        %v1678 = vshrl.u32 %v1677, 7
        %v1679 = vsub.s32 0, %v1678
        %v1680 = vrot.slane %v1655, %v1679
        %v1682 = vadd.f32 %v1675, %v1680
        %1683 = vst.msk [vmem:[#allocation2] sm:$0xff] %vm739, %v1682
        %p1684 = scmp.eq.s32.totalorder %s35, 1
        // Predicated region
        $region89: #{tpu_custom_call.1} parent=83 // pred_check
          %p1685 = pneg %p1684
        $region90: #{tpu_custom_call.1} parent=83 // pred_check_branch
          %1687 = sbr.rel (%p1685) target = $region92
        $region91: #{tpu_custom_call.1} parent=83 // pred_region
          %v1688 = vld [vmem:[%s12] sm:$0x1]
          %v1689 = vld [vmem:[%s13] sm:$0x1]
          %v1690 = vsel %vm739, %v1682, 0.0
          %1691 = vadd.xlane.f32.xlu0 %v1690
          %v1692 = vpop.xlane.xlu0 %1691
          %v1693 = vmul.f32 %v1692, %v1448
          %v1694 = vsub.f32 %v1682, %v1693
          %v1695 = vmul.f32 %v1694, %v1694
          %v1696 = vsel %vm739, %v1695, 0.0
          %1697 = vadd.xlane.f32.xlu0 %v1696
          %v1698 = vpop.xlane.xlu0 %1697
          %v1699 = vmul.f32 %v1698, %v1448
          %v1700 = vadd.f32 %v1699, 1e-05
          %v1701 = vrsqrt.pop %v1700
          %v1702 = vmul.f32 %v1694, %v1701
          %v1704 = vlaneseq
          %v1705 = vshrl.u32 %v1704, 7
          %v1706 = vsub.s32 0, %v1705
          %v1707 = vrot.slane %v1688, %v1706
          %v1709 = vmul.f32 %v1702, %v1707
          %v1711 = vlaneseq
          %v1712 = vshrl.u32 %v1711, 7
          %v1713 = vsub.s32 0, %v1712
          %v1714 = vrot.slane %v1689, %v1713
          %v1716 = vadd.f32 %v1709, %v1714
          %v1717 = vpack.c.bf16 %v1716, %v1716
          %v1718 = vld [vmem:[%s14] sm:$0xf]
          %v1719 = vld [vmem:[%s14 + $0x4] sm:$0xf]
          %v1720 = vld [vmem:[%s14 + $0x8] sm:$0xf]
          %v1721 = vld [vmem:[%s14 + $0xc] sm:$0xf]
          %v1722 = vld [vmem:[%s15] sm:$0x1]
          %v1724 = vlaneseq
          %v1725 = vshrl.u32 %v1724, 7
          %v1726 = vsub.s32 0, %v1725
          %v1727 = vrot.slane %v1722, %v1726
          %v1733 = vunpack.c.l.b16 %v1718
          %v1734 = vunpack.c.l.b16 %v1719
          %v1735 = vunpack.c.l.b16 %v1720
          %v1736 = vunpack.c.l.b16 %v1721
          %v1737 = vpack.c.b16 %v1734, %v1733
          %v1738 = vpack.c.b16 %v1736, %v1735
          %v1742 = vsel %vm739, %v1717, 0
          %1744 = vmatprep.subr.bf16.mxu0 0
          %1745 = vmatpush1.bf16.msra.mxu0 %v1737
          %1746 = vmatprep.subr.bf16.mxu0 0
          %1747 = vmatpush1.bf16.msra.mxu0 %v1738
          %1748 = vmatprep.subr.bf16.mxu0 0
          %1749 = vmatpush1.bf16.msra.mxu0 0
          %1750 = vmatprep.subr.bf16.mxu0 0
          %1751 = vmatpush1.bf16.msra.mxu0 0
          %1752 = vmatprep.subr.bf16.mxu0 0
          %1753 = vmatpush1.bf16.msra.mxu0 0
          %1754 = vmatprep.subr.bf16.mxu0 0
          %1755 = vmatpush1.bf16.msra.mxu0 0
          %1756 = vmatprep.subr.bf16.mxu0 0
          %1757 = vmatpush1.bf16.msra.mxu0 0
          %1758 = vmatprep.subr.bf16.mxu0 0
          %1759 = vmatpush1.bf16.msra.mxu0 0
          %1760 = vmatprep.subr.bf16.mxu0 0
          %1761 = vmatpush1.bf16.msra.mxu0 0
          %1762 = vmatprep.subr.bf16.mxu0 0
          %1763 = vmatpush1.bf16.msra.mxu0 0
          %1764 = vmatprep.subr.bf16.mxu0 0
          %1765 = vmatpush1.bf16.msra.mxu0 0
          %1766 = vmatprep.subr.bf16.mxu0 0
          %1767 = vmatpush1.bf16.msra.mxu0 0
          %1768 = vmatprep.subr.bf16.mxu0 0
          %1769 = vmatpush1.bf16.msra.mxu0 0
          %1770 = vmatprep.subr.bf16.mxu0 0
          %1771 = vmatpush1.bf16.msra.mxu0 0
          %1772 = vmatprep.subr.bf16.mxu0 0
          %1773 = vmatpush1.bf16.msra.mxu0 0
          %1774 = vmatprep.subr.bf16.mxu0 0
          %1775 = vmatpush1.bf16.msra.mxu0 0
          %1776 = vmatprep.mubr.bf16.mxu0 0
          %1777 = vmatmul.mubr.bf16.gmra.mrb[0].mxu0 %v1742
          %v1778 = vpop.f32.mrb[0].mxu0
          %v1779 = vadd.f32 %v1727, %v1778
          %v1780 = vpop.f32.mrb[0].mxu0
          %v1781 = vpop.f32.mrb[0].mxu0
          %v1782 = vpop.f32.mrb[0].mxu0
          %1783 = vdwg.mxu0
          %1784 = vst [vmem:[%s661] sm:$0xff] %v1779
        $region92: #{tpu_custom_call.1} parent=83 // pred_fallthru
          _
        %s1785 = sand.u32 %s446, 1
        %s1786 = scalar_lea.sflag [#allocation4], %s1785
        %s1787 = sand.u32 %s446, 1
        %s1788 = smul.addr %s1787, 8
        %s1789 = scalar_lea.vmem [#allocation3], %s1788
        // Predicated region
        $region93: #{tpu_custom_call.1} parent=83 // pred_check
          %p1790 = pneg %p456
        $region94: #{tpu_custom_call.1} parent=83 // pred_check_branch
          %1792 = sbr.rel (%p1790) target = $region96
        $region95: #{tpu_custom_call.1} parent=83 // pred_region
          %s1794 = ssub.s32 128, 128
          %1795 = vsyncadd %s1786, %s1794
          %s1796 = smul.addr %s34, 128
          %s1797 = scalar_lea.hbm %s16, %s1796
          %s1799 = sshll.u32 %s1789, 4
          %s1800 = int_to_ptr.vmem [resolvable:$true] %s1799
          %1802 = dma.vmem_to_hbm [thread:$0]  %s1800, 128, %s1797, %s1786
        $region96: #{tpu_custom_call.1} parent=83 // pred_fallthru
          _
      $region84: #{tpu_custom_call.1} parent=5 // pred_fallthru
        _
      %p1803 = scmp.le.s32.totalorder 2, %s25
      // Predicated region
      $region97: #{tpu_custom_call.1} parent=5 // pred_check
        %p1804 = pneg %p1803
      $region98: #{tpu_custom_call.1} parent=5 // pred_check_branch
        %1806 = sbr.rel (%p1804) target = $region100
      $region99: #{tpu_custom_call.1} parent=5 // pred_region
        %s1807 = ssub.s32 %s25, 2
        // Predicated region
        $region101: #{tpu_custom_call.1} parent=99 // pred_check
          %p1808 = pneg %p462
        $region102: #{tpu_custom_call.1} parent=99 // pred_check_branch
          %1810 = sbr.rel (%p1808) target = $region104
        $region103: #{tpu_custom_call.1} parent=99 // pred_region
          %s1811 = sand.u32 %s447, 1
          %s1812 = scalar_lea.sflag [#allocation4], %s1811
          %s1813 = sand.u32 %s447, 1
          %s1814 = smul.addr %s1813, 8
          %s1815 = scalar_lea.vmem [#allocation3], %s1814
          %1816 = dma.done %s1812, 128
        $region104: #{tpu_custom_call.1} parent=99 // pred_fallthru
          _
      $region100: #{tpu_custom_call.1} parent=5 // pred_fallthru
        _
    $region6: #{tpu_custom_call.1} parent=1 // loop_footer
      %s29 = sadd.s32 1, %s25
    $region7: #{tpu_custom_call.1} parent=1 // loop_footer_branch
      %24 = sbr.rel target = $region3
    $region8: #{tpu_custom_call.1} parent=1 // loop_exit
      _
    %1817 = vsyncpa [#allocation4], 1
    %s1818 = scalar_lea.sflag [#allocation4], 1
    %1819 = vsyncpa %s1818, 1

</llo_original>
